<compile_context>
chip_gen: v7x
topology: tpu7x:2x2x1
jax: 0.10.0
libtpu: 0.0.40
codegen_flags: <defaults>
</compile_context>

<pallas_src>
import functools

import jax
import jax.numpy as jnp
from jax import lax
from jax.experimental import pallas as pl
from jax.experimental.pallas import tpu as pltpu

THRESHOLD = 1e-12          # torch clamp(min=1e-12) before sqrt
NEG_SLOPE = 0.2            # LeakyReLU negative slope
P_HIGHEST = lax.Precision.HIGHEST


def _adjacency_rows(x_tile, x_full, row_offset):
    """Row tile of A = softmax(exp(-euclidean_dist(x)), axis=1).

    x_tile: (tm, fin) rows [row_offset, row_offset+tm); x_full: (bs, fin).
    Returns (tm, bs).
    """
    tm, fin = x_tile.shape
    bs = x_full.shape[0]

    # Pairwise squared distance via the Gram trick, on the MXU.  This is the
    # only cancellation-sensitive matmul -> full-f32 contraction.
    g = lax.dot_general(x_tile, x_full, (((1,), (1,)), ((), ())),
                        precision=P_HIGHEST, preferred_element_type=jnp.float32)
    r_tile = jnp.sum(x_tile * x_tile, axis=1, keepdims=True)          # (tm, 1)
    ones_1f = jnp.ones((1, fin), jnp.float32)
    r_full = lax.dot_general(ones_1f, x_full * x_full,                # (1, bs), lane-dense
                             (((1,), (1,)), ((), ())),
                             precision=P_HIGHEST,
                             preferred_element_type=jnp.float32)

    d2 = jnp.maximum(r_tile + r_full - 2.0 * g, 0.0)                  # (tm, bs)
    # Zero the self-distance exactly (matches the exact-difference math).
    rows = lax.broadcasted_iota(jnp.int32, (tm, bs), 0) + row_offset
    cols = lax.broadcasted_iota(jnp.int32, (tm, bs), 1)
    d2 = jnp.where(rows == cols, 0.0, d2)

    dist = jnp.exp(-jnp.sqrt(jnp.maximum(d2, THRESHOLD)))             # in (0, 1]
    # Row softmax; dist <= 1 so exp(dist) <= e -> no max-subtraction needed.
    e = jnp.exp(dist)
    inv_rowsum = pl.reciprocal(jnp.sum(e, axis=1, keepdims=True), approx=False)
    return e * inv_rowsum                                             # (tm, bs)


def _pass1_kernel(x_tile_ref, x_full_ref, w_ref, colsum_ref, ut_ref, *, tm):
    """Accumulate colsum(A) (1,bs) and uT = s^T A (fout,bs) across row tiles."""
    t = pl.program_id(0)

    @pl.when(t == 0)
    def _():
        colsum_ref[...] = jnp.zeros_like(colsum_ref)
        ut_ref[...] = jnp.zeros_like(ut_ref)

    x_tile = x_tile_ref[...]                                          # (tm, fin)
    a = _adjacency_rows(x_tile, x_full_ref[...], t * tm)              # (tm, bs)

    colsum_ref[...] += jnp.sum(a, axis=0, keepdims=True)              # (1, bs)

    # sT[:, tile] = W @ x_tile^T  -> (fout, tm); NT dot, no explicit transpose.
    s_t = lax.dot_general(w_ref[...], x_tile, (((1,), (1,)), ((), ())),
                          precision=P_HIGHEST,
                          preferred_element_type=jnp.float32)
    # uT += sT_tile @ A_tile  -> (fout, bs)
    ut_ref[...] += lax.dot_general(s_t, a, (((1,), (0,)), ((), ())),
                                   precision=P_HIGHEST,
                                   preferred_element_type=jnp.float32)


def _pass2_kernel(x_tile_ref, x_full_ref, ut_ref, colsum_ref, b_ref, ht_ref, *, tm):
    """Emit hT[:, tile] = leaky_relu((uT/colsum) @ A_tile^T + bias)."""
    t = pl.program_id(0)
    a = _adjacency_rows(x_tile_ref[...], x_full_ref[...], t * tm)     # (tm, bs)

    m = ut_ref[...] * pl.reciprocal(colsum_ref[...], approx=False)    # (fout, bs)
    # hT_tile[f, i] = sum_k m[f, k] * a[i, k]  -> (fout, tm); lane axis = rows.
    h = lax.dot_general(m, a, (((1,), (1,)), ((), ())),
                        precision=P_HIGHEST,
                        preferred_element_type=jnp.float32)
    h = h + b_ref[...]                                                # (fout, 1) broadcast
    ht_ref[...] = jnp.where(h > 0.0, h, NEG_SLOPE * h).astype(ht_ref.dtype)


def _pick_row_tile(bs):
    for tm in (256, 128):
        if bs % tm == 0:
            return tm
    return bs  # small / irregular batch sizes: single full-row tile


def graph_nodes_forward(x, w, b):
    """x: (bs, fin) f32, w: (fout, fin) f32 (PyTorch Linear layout), b: (fout,) f32."""
    x = x.astype(jnp.float32)
    w = w.astype(jnp.float32)
    bs, fin = x.shape
    fout = w.shape[0]
    tm = _pick_row_tile(bs)
    n_tiles = bs // tm
    b_col = b.astype(jnp.float32).reshape(fout, 1)

    # Footprint-based VMEM limit with 2x headroom, capped well under v7x's
    # 64 MiB physical VMEM per TensorCore.
    est_bytes = 4 * (
        2 * bs * fin            # resident full-x block (double-buffered)
        + 2 * tm * fin          # x row tile
        + 2 * fout * fin        # weight
        + 2 * (fout * bs + bs)  # uT / colsum accumulators & inputs
        + 6 * tm * bs           # G / dist / A intermediates
        + 2 * fout * bs         # scaled uT
        + 2 * fout * tm         # sT / hT tiles
    )
    vmem_limit = int(min(48 * 1024 * 1024, max(32 * 1024 * 1024, 2 * est_bytes)))

    # ---- pass 1: accumulate colsum(A) and uT = s^T A across row tiles ----
    colsum, ut = pl.pallas_call(
        functools.partial(_pass1_kernel, tm=tm),
        out_shape=(jax.ShapeDtypeStruct((1, bs), jnp.float32),
                   jax.ShapeDtypeStruct((fout, bs), jnp.float32)),
        grid=(n_tiles,),
        in_specs=[
            pl.BlockSpec((tm, fin), lambda t: (t, 0)),    # x row tile
            pl.BlockSpec((bs, fin), lambda t: (0, 0)),    # full x (distance columns)
            pl.BlockSpec((fout, fin), lambda t: (0, 0)),  # W
        ],
        out_specs=(
            pl.BlockSpec((1, bs), lambda t: (0, 0)),      # colsum accumulator
            pl.BlockSpec((fout, bs), lambda t: (0, 0)),   # uT accumulator
        ),
        compiler_params=pltpu.CompilerParams(
            dimension_semantics=("arbitrary",),
            vmem_limit_bytes=vmem_limit),
    )(x, x, w)

    # ---- pass 2: per row tile, hT[:, tile] = (uT/colsum) @ A_tile^T ----
    ht = pl.pallas_call(
        functools.partial(_pass2_kernel, tm=tm),
        out_shape=jax.ShapeDtypeStruct((fout, bs), jnp.float32),
        grid=(n_tiles,),
        in_specs=[
            pl.BlockSpec((tm, fin), lambda t: (t, 0)),    # x row tile
            pl.BlockSpec((bs, fin), lambda t: (0, 0)),    # full x
            pl.BlockSpec((fout, bs), lambda t: (0, 0)),   # uT
            pl.BlockSpec((1, bs), lambda t: (0, 0)),      # colsum
            pl.BlockSpec((fout, 1), lambda t: (0, 0)),    # bias (column vector)
        ],
        out_specs=pl.BlockSpec((fout, tm), lambda t: (0, t)),
        compiler_params=pltpu.CompilerParams(
            dimension_semantics=("parallel",),            # v7x: both TensorCores
            vmem_limit_bytes=vmem_limit),
    )(x, x, ut, colsum, b_col)

    # Kernel stores are lane-dense (rows on the lane axis); restore (bs, fout)
    # layout outside the kernel.
    return ht.T


def graph_nodes_reference(x, w, b):
    """Pure-JAX reference mirroring the PyTorch module (exact diffs, f32 matmuls)."""
    diff = x[None, :, :] - x[:, None, :]                   # x_l - x_m
    d = jnp.sqrt(jnp.maximum(jnp.sum(diff * diff, axis=2), THRESHOLD))
    dist = jnp.exp(-d)
    A = jax.nn.softmax(dist, axis=1)
    Alsum = jnp.sum(A, axis=0)
    Af = jnp.matmul(A / Alsum[None, :], A.T, precision=P_HIGHEST)
    s = jnp.matmul(x, w.T, precision=P_HIGHEST)
    h = jnp.matmul(Af, s, precision=P_HIGHEST) + b[None, :]
    return jnp.where(h > 0, h, NEG_SLOPE * h)


if __name__ == "__main__":
    bs, fin, fout = 8, 16, 32
    key = jax.random.PRNGKey(0)
    kx, kw, kb = jax.random.split(key, 3)

    x = jax.random.normal(kx, (bs, fin), dtype=jnp.float32)
    # Deterministic synthetic parameters (nn.Linear weight + uninitialized bias
    # of the PyTorch module replaced with fixed random draws).
    w = jax.random.normal(kw, (fout, fin), dtype=jnp.float32) / jnp.sqrt(fin)
    b = 0.1 * jax.random.normal(kb, (fout,), dtype=jnp.float32)

    out = graph_nodes_forward(x, w, b)
    jax.block_until_ready(out)

    ref = graph_nodes_reference(x, w, b)
    assert out.shape == (bs, fout)
    max_err = float(jnp.max(jnp.abs(out - ref)))
    assert jnp.allclose(out, ref, atol=1e-4, rtol=1e-4), (
        f"mismatch vs reference (max abs err {max_err:.3e})")

    print("KERNEL_OK")
</pallas_src>

<mosaic_0001>
module attributes {stable_mosaic.version = 11 : i64} {
  func.func @_pass1_kernel(%arg0: i32, %arg1: memref<8x16xf32, #tpu.memory_space<vmem>>, %arg2: memref<8x16xf32, #tpu.memory_space<vmem>>, %arg3: memref<32x16xf32, #tpu.memory_space<vmem>>, %arg4: memref<1x8xf32, #tpu.memory_space<vmem>>, %arg5: memref<32x8xf32, #tpu.memory_space<vmem>>) attributes {dimension_semantics = [#tpu.dimension_semantics<arbitrary>], iteration_bounds = array<i64: 1>, scalar_prefetch = 0 : i64, scratch_operands = 0 : i64, tpu.core_type = #tpu.core_type<tc>, window_params = [{transform_indices = @transform_0, window_bounds = array<i64: 8, 16>}, {pipeline_mode = #tpu.pipeline_mode<synchronous>, transform_indices = @transform_1, window_bounds = array<i64: 8, 16>}, {pipeline_mode = #tpu.pipeline_mode<synchronous>, transform_indices = @transform_2, window_bounds = array<i64: 32, 16>}, {pipeline_mode = #tpu.pipeline_mode<synchronous>, transform_indices = @transform_3, window_bounds = array<i64: 1, 8>}, {pipeline_mode = #tpu.pipeline_mode<synchronous>, transform_indices = @transform_4, window_bounds = array<i64: 32, 8>}]} {
    %c0_i32 = arith.constant 0 : i32
    %0 = arith.cmpi eq, %arg0, %c0_i32 : i32
    %1 = arith.extui %0 : i1 to i32
    %c0_i32_0 = arith.constant 0 : i32
    %2 = arith.cmpi ne, %1, %c0_i32_0 : i32
    scf.if %2 {
      %cst_26 = arith.constant 0.000000e+00 : f32
      %51 = vector.broadcast %cst_26 : f32 to vector<1x8xf32>
      %c0_27 = arith.constant 0 : index
      %c0_28 = arith.constant 0 : index
      %52 = vector.load %arg4[%c0_27, %c0_28] : memref<1x8xf32, #tpu.memory_space<vmem>>, vector<1x8xf32>
      tpu.vector_store %arg4[%c0_27, %c0_28], %51 {strides = array<i32>} : memref<1x8xf32, #tpu.memory_space<vmem>>, vector<1x8xf32>,
      %cst_29 = arith.constant 0.000000e+00 : f32
      %53 = vector.broadcast %cst_29 : f32 to vector<32x8xf32>
      %c0_30 = arith.constant 0 : index
      %c0_31 = arith.constant 0 : index
      %54 = vector.load %arg5[%c0_30, %c0_31] : memref<32x8xf32, #tpu.memory_space<vmem>>, vector<32x8xf32>
      tpu.vector_store %arg5[%c0_30, %c0_31], %53 {strides = array<i32>} : memref<32x8xf32, #tpu.memory_space<vmem>>, vector<32x8xf32>,
    } else {
    }
    %c0 = arith.constant 0 : index
    %c0_1 = arith.constant 0 : index
    %3 = vector.load %arg1[%c0, %c0_1] : memref<8x16xf32, #tpu.memory_space<vmem>>, vector<8x16xf32>
    %c0_2 = arith.constant 0 : index
    %c0_3 = arith.constant 0 : index
    %4 = vector.load %arg2[%c0_2, %c0_3] : memref<8x16xf32, #tpu.memory_space<vmem>>, vector<8x16xf32>
    %c8_i32 = arith.constant 8 : i32
    %5 = arith.muli %arg0, %c8_i32 : i32
    %cst = arith.constant dense<0.000000e+00> : vector<8x8xf32>
    %6 = tpu.matmul %3, %4, %cst {dimension_numbers = #tpu.dot_dimension_numbers<[1], [1], [0], [0], [0, 0, 1, 0], [], []>, precision = #tpu.contract_precision<fp32>} : vector<8x16xf32>, vector<8x16xf32>, vector<8x8xf32> -> vector<8x8xf32>
    %7 = arith.mulf %3, %3 : vector<8x16xf32>
    %cst_4 = arith.constant dense<0.000000e+00> : vector<8xf32>
    %8 = vector.multi_reduction <add>, %7, %cst_4 [1] : vector<8x16xf32> to vector<8xf32>
    %9 = vector.shape_cast %8 : vector<8xf32> to vector<8x1xf32>
    %cst_5 = arith.constant 1.000000e+00 : f32
    %10 = vector.broadcast %cst_5 : f32 to vector<1x16xf32>
    %11 = arith.mulf %4, %4 : vector<8x16xf32>
    %cst_6 = arith.constant dense<0.000000e+00> : vector<1x8xf32>
    %12 = tpu.matmul %10, %11, %cst_6 {dimension_numbers = #tpu.dot_dimension_numbers<[1], [1], [0], [0], [0, 0, 1, 0], [], []>, precision = #tpu.contract_precision<fp32>} : vector<1x16xf32>, vector<8x16xf32>, vector<1x8xf32> -> vector<1x8xf32>
    %13 = vector.broadcast %9 : vector<8x1xf32> to vector<8x8xf32>
    %14 = vector.broadcast %12 : vector<1x8xf32> to vector<8x8xf32>
    %15 = arith.addf %13, %14 : vector<8x8xf32>
    %cst_7 = arith.constant 2.000000e+00 : f32
    %16 = vector.broadcast %cst_7 : f32 to vector<8x8xf32>
    %17 = arith.mulf %16, %6 : vector<8x8xf32>
    %18 = arith.subf %15, %17 : vector<8x8xf32>
    %cst_8 = arith.constant 0.000000e+00 : f32
    %19 = vector.broadcast %cst_8 : f32 to vector<8x8xf32>
    %20 = arith.maximumf %18, %19 : vector<8x8xf32>
    %21 = tpu.iota {dimensions = array<i32: 0>} : vector<8x8xi32>
    %22 = vector.broadcast %5 : i32 to vector<8x8xi32>
    %23 = arith.addi %21, %22 : vector<8x8xi32>
    %24 = tpu.iota {dimensions = array<i32: 1>} : vector<8x8xi32>
    %25 = arith.cmpi eq, %23, %24 : vector<8x8xi32>
    %cst_9 = arith.constant 0.000000e+00 : f32
    %26 = vector.broadcast %cst_9 : f32 to vector<8x8xf32>
    %27 = arith.select %25, %26, %20 : vector<8x8xi1>, vector<8x8xf32>
    %cst_10 = arith.constant 9.99999996E-13 : f32
    %28 = vector.broadcast %cst_10 : f32 to vector<8x8xf32>
    %29 = arith.maximumf %27, %28 : vector<8x8xf32>
    %30 = math.sqrt %29 : vector<8x8xf32>
    %cst_11 = arith.constant 0.000000e+00 : f32
    %31 = vector.broadcast %cst_11 : f32 to vector<8x8xf32>
    %32 = arith.subf %31, %30 : vector<8x8xf32>
    %33 = math.exp %32 : vector<8x8xf32>
    %34 = math.exp %33 : vector<8x8xf32>
    %cst_12 = arith.constant dense<0.000000e+00> : vector<8xf32>
    %35 = vector.multi_reduction <add>, %34, %cst_12 [1] : vector<8x8xf32> to vector<8xf32>
    %36 = vector.shape_cast %35 : vector<8xf32> to vector<8x1xf32>
    %37 = tpu.reciprocal %36 : vector<8x1xf32> -> vector<8x1xf32>
    %38 = vector.broadcast %37 : vector<8x1xf32> to vector<8x8xf32>
    %39 = arith.mulf %34, %38 : vector<8x8xf32>
    %c0_13 = arith.constant 0 : index
    %c0_14 = arith.constant 0 : index
    %40 = vector.load %arg4[%c0_13, %c0_14] : memref<1x8xf32, #tpu.memory_space<vmem>>, vector<1x8xf32>
    %cst_15 = arith.constant dense<0.000000e+00> : vector<8xf32>
    %41 = vector.multi_reduction <add>, %39, %cst_15 [0] : vector<8x8xf32> to vector<8xf32>
    %42 = vector.shape_cast %41 : vector<8xf32> to vector<1x8xf32>
    %43 = arith.addf %40, %42 : vector<1x8xf32>
    %c0_16 = arith.constant 0 : index
    %c0_17 = arith.constant 0 : index
    %44 = vector.load %arg4[%c0_16, %c0_17] : memref<1x8xf32, #tpu.memory_space<vmem>>, vector<1x8xf32>
    tpu.vector_store %arg4[%c0_16, %c0_17], %43 {strides = array<i32>} : memref<1x8xf32, #tpu.memory_space<vmem>>, vector<1x8xf32>,
    %c0_18 = arith.constant 0 : index
    %c0_19 = arith.constant 0 : index
    %45 = vector.load %arg3[%c0_18, %c0_19] : memref<32x16xf32, #tpu.memory_space<vmem>>, vector<32x16xf32>
    %cst_20 = arith.constant dense<0.000000e+00> : vector<32x8xf32>
    %46 = tpu.matmul %45, %3, %cst_20 {dimension_numbers = #tpu.dot_dimension_numbers<[1], [1], [0], [0], [0, 0, 1, 0], [], []>, precision = #tpu.contract_precision<fp32>} : vector<32x16xf32>, vector<8x16xf32>, vector<32x8xf32> -> vector<32x8xf32>
    %c0_21 = arith.constant 0 : index
    %c0_22 = arith.constant 0 : index
    %47 = vector.load %arg5[%c0_21, %c0_22] : memref<32x8xf32, #tpu.memory_space<vmem>>, vector<32x8xf32>
    %cst_23 = arith.constant dense<0.000000e+00> : vector<32x8xf32>
    %48 = tpu.matmul %46, %39, %cst_23 {dimension_numbers = #tpu.dot_dimension_numbers<[1], [0], [0], [1], [0, 0, 1, 1], [], []>, precision = #tpu.contract_precision<fp32>} : vector<32x8xf32>, vector<8x8xf32>, vector<32x8xf32> -> vector<32x8xf32>
    %49 = arith.addf %47, %48 : vector<32x8xf32>
    %c0_24 = arith.constant 0 : index
    %c0_25 = arith.constant 0 : index
    %50 = vector.load %arg5[%c0_24, %c0_25] : memref<32x8xf32, #tpu.memory_space<vmem>>, vector<32x8xf32>
    tpu.vector_store %arg5[%c0_24, %c0_25], %49 {strides = array<i32>} : memref<32x8xf32, #tpu.memory_space<vmem>>, vector<32x8xf32>,
    return
  }
  func.func @transform_0(%arg0: i32) -> (i32, i32) {
    %c0_i32 = arith.constant 0 : i32
    %c0_i32_0 = arith.constant 0 : i32
    return %arg0, %c0_i32 : i32, i32
  }
  func.func @transform_1(%arg0: i32) -> (i32, i32) {
    %c0_i32 = arith.constant 0 : i32
    %c0_i32_0 = arith.constant 0 : i32
    %c0_i32_1 = arith.constant 0 : i32
    return %c0_i32, %c0_i32_0 : i32, i32
  }
  func.func @transform_2(%arg0: i32) -> (i32, i32) {
    %c0_i32 = arith.constant 0 : i32
    %c0_i32_0 = arith.constant 0 : i32
    %c0_i32_1 = arith.constant 0 : i32
    return %c0_i32, %c0_i32_0 : i32, i32
  }
  func.func @transform_3(%arg0: i32) -> (i32, i32) {
    %c0_i32 = arith.constant 0 : i32
    %c0_i32_0 = arith.constant 0 : i32
    %c0_i32_1 = arith.constant 0 : i32
    return %c0_i32, %c0_i32_0 : i32, i32
  }
  func.func @transform_4(%arg0: i32) -> (i32, i32) {
    %c0_i32 = arith.constant 0 : i32
    %c0_i32_0 = arith.constant 0 : i32
    %c0_i32_1 = arith.constant 0 : i32
    return %c0_i32, %c0_i32_0 : i32, i32
  }
}

</mosaic_0001>

<llo_original>
// kernel: tpu_custom_call.1
$region0: #{tpu_custom_call.1}
  #allocation0 [shape = 'u32[]', space=smem, size = 0x4, offset = 0x4, fixed_abs, tag = 'smem constant byte address 0x4 - core index']
  #allocation1 [shape = 'u32[144,128]{1,0:T(1,128)}', space=vmem, size = 0x12000, scoped, tag = 'internal scratch']
  %s0 = inlined_call_operand.vmem [shape: f32[8,16], index: 0, kind: input, shape index: {}]
  %s1 = inlined_call_operand.vmem [shape: f32[8,16], index: 1, kind: input, shape index: {}]
  %s2 = inlined_call_operand.vmem [shape: f32[32,16], index: 2, kind: input, shape index: {}]
  %s3 = inlined_call_operand.hbm [shape: f32[1,8], index: 3, kind: output, shape index: {0}]
  %s4 = inlined_call_operand.vmem [shape: f32[32,8], index: 4, kind: output, shape index: {1}]
  %5 = xla_tuple %s3, %s4
  %s6 = sld [smem:[#allocation0]]
  $region34: #{tpu_custom_call.1} parent=0
    _
  %s8 = ssub.s32 1, %s6
  %s9 = scalar_select 0, %s8, %s6
  $region1: #{tpu_custom_call.1} parent=0
    #allocation2 [shape = 'u8[512]{0}', space=vmem, size = 0x400, scoped, tag = 'output window, operand 0, single buffered']
    #allocation3 [shape = 's32[1]{0}', space=sflag, size = 0x4, scoped, tag = 'scoped memory for tpu_custom_call.1']
    %10 = vsyncpa [#allocation3], 0
    // Predicated region
    $region2: #{tpu_custom_call.1} parent=1 // pred_check
      _
    $region3: #{tpu_custom_call.1} parent=1 // pred_check_branch
      %12 = sbr.rel (0) target = $region5
    $region4: #{tpu_custom_call.1} parent=1 // pred_region
      _
    $region5: #{tpu_custom_call.1} parent=1 // pred_fallthru
      _
    // Predicated region
    $region6: #{tpu_custom_call.1} parent=1 // pred_check
      _
    $region7: #{tpu_custom_call.1} parent=1 // pred_check_branch
      %14 = sbr.rel (0) target = $region9
    $region8: #{tpu_custom_call.1} parent=1 // pred_region
      _
    $region9: #{tpu_custom_call.1} parent=1 // pred_fallthru
      _
    // Predicated region
    $region10: #{tpu_custom_call.1} parent=1 // pred_check
      _
    $region11: #{tpu_custom_call.1} parent=1 // pred_check_branch
      %16 = sbr.rel (0) target = $region13
    $region12: #{tpu_custom_call.1} parent=1 // pred_region
      _
    $region13: #{tpu_custom_call.1} parent=1 // pred_fallthru
      _
    %p17 = scmp.eq.s32.totalorder 0, 0
    // Predicated region
    $region14: #{tpu_custom_call.1} parent=1 // pred_check
      %p18 = pneg %p17
    $region15: #{tpu_custom_call.1} parent=1 // pred_check_branch
      %20 = sbr.rel (%p18) target = $region17
    $region16: #{tpu_custom_call.1} parent=1 // pred_region
      %vm21 = vcmask 57344
      %22 = vst.msk [vmem:[#allocation2] sm:$0x1] %vm21, 0.0
      %vm23 = vcmask 64512
      %24 = vst.msk [vmem:[%s4] sm:$0xff] %vm23, 0.0
      %25 = vst.msk [vmem:[%s4 + $0x8] sm:$0xff] %vm23, 0.0
      %26 = vst.msk [vmem:[%s4 + $0x10] sm:$0xff] %vm23, 0.0
      %27 = vst.msk [vmem:[%s4 + $0x18] sm:$0xff] %vm23, 0.0
    $region17: #{tpu_custom_call.1} parent=1 // pred_fallthru
      _
    %v28 = vld [vmem:[%s0] sm:$0xff]
    %v29 = vld [vmem:[%s1] sm:$0xff]
    %s30 = smul.u32 0, 8
    %vm31 = vcmask 130048
    %v33 = vsel %vm31, %v28, 0
    %v36 = vsel %vm31, %v29, 0
    %38 = vmatprep.subr.mxu0 0.0
    %v39 = vand.u32 %v36, 4294901760
    %40 = vmatpush1.xpose.msra.mxu0 %v39
    %41 = vmatprep.subr.mxu0 0.0
    %42 = vmatpush1.xpose.msra.mxu0 0.0
    %43 = vmatprep.subr.mxu0 0.0
    %44 = vmatpush1.xpose.msra.mxu0 0.0
    %45 = vmatprep.subr.mxu0 0.0
    %46 = vmatpush1.xpose.msra.mxu0 0.0
    %47 = vmatprep.subr.mxu0 0.0
    %48 = vmatpush1.xpose.msra.mxu0 0.0
    %49 = vmatprep.subr.mxu0 0.0
    %50 = vmatpush1.xpose.msra.mxu0 0.0
    %51 = vmatprep.subr.mxu0 0.0
    %52 = vmatpush1.xpose.msra.mxu0 0.0
    %53 = vmatprep.subr.mxu0 0.0
    %54 = vmatpush1.xpose.msra.mxu0 0.0
    %55 = vmatprep.subr.mxu0 0.0
    %56 = vmatpush1.xpose.msra.mxu0 0.0
    %57 = vmatprep.subr.mxu0 0.0
    %58 = vmatpush1.xpose.msra.mxu0 0.0
    %59 = vmatprep.subr.mxu0 0.0
    %60 = vmatpush1.xpose.msra.mxu0 0.0
    %61 = vmatprep.subr.mxu0 0.0
    %62 = vmatpush1.xpose.msra.mxu0 0.0
    %63 = vmatprep.subr.mxu0 0.0
    %64 = vmatpush1.xpose.msra.mxu0 0.0
    %65 = vmatprep.subr.mxu0 0.0
    %66 = vmatpush1.xpose.msra.mxu0 0.0
    %67 = vmatprep.subr.mxu0 0.0
    %68 = vmatpush1.xpose.msra.mxu0 0.0
    %69 = vmatprep.subr.mxu0 0.0
    %70 = vmatpush1.xpose.msra.mxu0 0.0
    %71 = vmatprep.subr.mxu0 0.0
    %72 = vmatpush1.xpose.msra.mxu0 0.0
    %73 = vmatprep.subr.mxu0 0.0
    %74 = vmatpush1.xpose.msra.mxu0 0.0
    %75 = vmatprep.subr.mxu0 0.0
    %76 = vmatpush1.xpose.msra.mxu0 0.0
    %77 = vmatprep.subr.mxu0 0.0
    %78 = vmatpush1.xpose.msra.mxu0 0.0
    %79 = vmatprep.subr.mxu0 0.0
    %80 = vmatpush1.xpose.msra.mxu0 0.0
    %81 = vmatprep.subr.mxu0 0.0
    %82 = vmatpush1.xpose.msra.mxu0 0.0
    %83 = vmatprep.subr.mxu0 0.0
    %84 = vmatpush1.xpose.msra.mxu0 0.0
    %85 = vmatprep.subr.mxu0 0.0
    %86 = vmatpush1.xpose.msra.mxu0 0.0
    %87 = vmatprep.subr.mxu0 0.0
    %88 = vmatpush1.xpose.msra.mxu0 0.0
    %89 = vmatprep.subr.mxu0 0.0
    %90 = vmatpush1.xpose.msra.mxu0 0.0
    %91 = vmatprep.subr.mxu0 0.0
    %92 = vmatpush1.xpose.msra.mxu0 0.0
    %93 = vmatprep.subr.mxu0 0.0
    %94 = vmatpush1.xpose.msra.mxu0 0.0
    %95 = vmatprep.subr.mxu0 0.0
    %96 = vmatpush1.xpose.msra.mxu0 0.0
    %97 = vmatprep.subr.mxu0 0.0
    %98 = vmatpush1.xpose.msra.mxu0 0.0
    %99 = vmatprep.subr.mxu0 0.0
    %100 = vmatpush1.xpose.msra.mxu0 0.0
    %101 = vmatprep.subr.mxu0 0.0
    %102 = vmatpush1.xpose.msra.mxu0 0.0
    %103 = vmatprep.mubr.f32.mxu0 0.0
    %v104 = vand.u32 %v33, 4294901760
    %v105 = vsub.f32 %v33, %v104
    %v106 = vand.u32 %v105, 4294901760
    %v107 = vsub.f32 %v105, %v106
    %v108 = vand.u32 %v107, 4294901760
    %109 = vmatmul.mubr.f32.gmra.mrb[0].mxu0 %v108
    %v110 = vpop.f32.mrb[0].mxu0
    %v111 = vadd.f32 0.0, %v110
    %v112 = vpop.f32.mrb[0].mxu0
    %113 = vdwg.mxu0
    %114 = vmatprep.subr.mxu0 0.0
    %v115 = vand.u32 %v36, 4294901760
    %v116 = vsub.f32 %v36, %v115
    %v117 = vand.u32 %v116, 4294901760
    %v118 = vsub.f32 %v116, %v117
    %v119 = vand.u32 %v118, 4294901760
    %120 = vmatpush1.xpose.msra.mxu0 %v119
    %121 = vmatprep.subr.mxu0 0.0
    %122 = vmatpush1.xpose.msra.mxu0 0.0
    %123 = vmatprep.subr.mxu0 0.0
    %124 = vmatpush1.xpose.msra.mxu0 0.0
    %125 = vmatprep.subr.mxu0 0.0
    %126 = vmatpush1.xpose.msra.mxu0 0.0
    %127 = vmatprep.subr.mxu0 0.0
    %128 = vmatpush1.xpose.msra.mxu0 0.0
    %129 = vmatprep.subr.mxu0 0.0
    %130 = vmatpush1.xpose.msra.mxu0 0.0
    %131 = vmatprep.subr.mxu0 0.0
    %132 = vmatpush1.xpose.msra.mxu0 0.0
    %133 = vmatprep.subr.mxu0 0.0
    %134 = vmatpush1.xpose.msra.mxu0 0.0
    %135 = vmatprep.subr.mxu0 0.0
    %136 = vmatpush1.xpose.msra.mxu0 0.0
    %137 = vmatprep.subr.mxu0 0.0
    %138 = vmatpush1.xpose.msra.mxu0 0.0
    %139 = vmatprep.subr.mxu0 0.0
    %140 = vmatpush1.xpose.msra.mxu0 0.0
    %141 = vmatprep.subr.mxu0 0.0
    %142 = vmatpush1.xpose.msra.mxu0 0.0
    %143 = vmatprep.subr.mxu0 0.0
    %144 = vmatpush1.xpose.msra.mxu0 0.0
    %145 = vmatprep.subr.mxu0 0.0
    %146 = vmatpush1.xpose.msra.mxu0 0.0
    %147 = vmatprep.subr.mxu0 0.0
    %148 = vmatpush1.xpose.msra.mxu0 0.0
    %149 = vmatprep.subr.mxu0 0.0
    %150 = vmatpush1.xpose.msra.mxu0 0.0
    %151 = vmatprep.subr.mxu0 0.0
    %152 = vmatpush1.xpose.msra.mxu0 0.0
    %153 = vmatprep.subr.mxu0 0.0
    %154 = vmatpush1.xpose.msra.mxu0 0.0
    %155 = vmatprep.subr.mxu0 0.0
    %156 = vmatpush1.xpose.msra.mxu0 0.0
    %157 = vmatprep.subr.mxu0 0.0
    %158 = vmatpush1.xpose.msra.mxu0 0.0
    %159 = vmatprep.subr.mxu0 0.0
    %160 = vmatpush1.xpose.msra.mxu0 0.0
    %161 = vmatprep.subr.mxu0 0.0
    %162 = vmatpush1.xpose.msra.mxu0 0.0
    %163 = vmatprep.subr.mxu0 0.0
    %164 = vmatpush1.xpose.msra.mxu0 0.0
    %165 = vmatprep.subr.mxu0 0.0
    %166 = vmatpush1.xpose.msra.mxu0 0.0
    %167 = vmatprep.subr.mxu0 0.0
    %168 = vmatpush1.xpose.msra.mxu0 0.0
    %169 = vmatprep.subr.mxu0 0.0
    %170 = vmatpush1.xpose.msra.mxu0 0.0
    %171 = vmatprep.subr.mxu0 0.0
    %172 = vmatpush1.xpose.msra.mxu0 0.0
    %173 = vmatprep.subr.mxu0 0.0
    %174 = vmatpush1.xpose.msra.mxu0 0.0
    %175 = vmatprep.subr.mxu0 0.0
    %176 = vmatpush1.xpose.msra.mxu0 0.0
    %177 = vmatprep.subr.mxu0 0.0
    %178 = vmatpush1.xpose.msra.mxu0 0.0
    %179 = vmatprep.subr.mxu0 0.0
    %180 = vmatpush1.xpose.msra.mxu0 0.0
    %181 = vmatprep.subr.mxu0 0.0
    %182 = vmatpush1.xpose.msra.mxu0 0.0
    %183 = vmatprep.mubr.f32.mxu0 0.0
    %v184 = vand.u32 %v33, 4294901760
    %185 = vmatmul.mubr.f32.gmra.mrb[0].mxu0 %v184
    %v186 = vpop.f32.mrb[0].mxu0
    %v187 = vadd.f32 %v111, %v186
    %v188 = vpop.f32.mrb[0].mxu0
    %189 = vdwg.mxu0
    %190 = vmatprep.subr.mxu0 0.0
    %v191 = vand.u32 %v36, 4294901760
    %v192 = vsub.f32 %v36, %v191
    %193 = vmatpush1.xpose.msra.mxu0 %v192
    %194 = vmatprep.subr.mxu0 0.0
    %195 = vmatpush1.xpose.msra.mxu0 0.0
    %196 = vmatprep.subr.mxu0 0.0
    %197 = vmatpush1.xpose.msra.mxu0 0.0
    %198 = vmatprep.subr.mxu0 0.0
    %199 = vmatpush1.xpose.msra.mxu0 0.0
    %200 = vmatprep.subr.mxu0 0.0
    %201 = vmatpush1.xpose.msra.mxu0 0.0
    %202 = vmatprep.subr.mxu0 0.0
    %203 = vmatpush1.xpose.msra.mxu0 0.0
    %204 = vmatprep.subr.mxu0 0.0
    %205 = vmatpush1.xpose.msra.mxu0 0.0
    %206 = vmatprep.subr.mxu0 0.0
    %207 = vmatpush1.xpose.msra.mxu0 0.0
    %208 = vmatprep.subr.mxu0 0.0
    %209 = vmatpush1.xpose.msra.mxu0 0.0
    %210 = vmatprep.subr.mxu0 0.0
    %211 = vmatpush1.xpose.msra.mxu0 0.0
    %212 = vmatprep.subr.mxu0 0.0
    %213 = vmatpush1.xpose.msra.mxu0 0.0
    %214 = vmatprep.subr.mxu0 0.0
    %215 = vmatpush1.xpose.msra.mxu0 0.0
    %216 = vmatprep.subr.mxu0 0.0
    %217 = vmatpush1.xpose.msra.mxu0 0.0
    %218 = vmatprep.subr.mxu0 0.0
    %219 = vmatpush1.xpose.msra.mxu0 0.0
    %220 = vmatprep.subr.mxu0 0.0
    %221 = vmatpush1.xpose.msra.mxu0 0.0
    %222 = vmatprep.subr.mxu0 0.0
    %223 = vmatpush1.xpose.msra.mxu0 0.0
    %224 = vmatprep.subr.mxu0 0.0
    %225 = vmatpush1.xpose.msra.mxu0 0.0
    %226 = vmatprep.subr.mxu0 0.0
    %227 = vmatpush1.xpose.msra.mxu0 0.0
    %228 = vmatprep.subr.mxu0 0.0
    %229 = vmatpush1.xpose.msra.mxu0 0.0
    %230 = vmatprep.subr.mxu0 0.0
    %231 = vmatpush1.xpose.msra.mxu0 0.0
    %232 = vmatprep.subr.mxu0 0.0
    %233 = vmatpush1.xpose.msra.mxu0 0.0
    %234 = vmatprep.subr.mxu0 0.0
    %235 = vmatpush1.xpose.msra.mxu0 0.0
    %236 = vmatprep.subr.mxu0 0.0
    %237 = vmatpush1.xpose.msra.mxu0 0.0
    %238 = vmatprep.subr.mxu0 0.0
    %239 = vmatpush1.xpose.msra.mxu0 0.0
    %240 = vmatprep.subr.mxu0 0.0
    %241 = vmatpush1.xpose.msra.mxu0 0.0
    %242 = vmatprep.subr.mxu0 0.0
    %243 = vmatpush1.xpose.msra.mxu0 0.0
    %244 = vmatprep.subr.mxu0 0.0
    %245 = vmatpush1.xpose.msra.mxu0 0.0
    %246 = vmatprep.subr.mxu0 0.0
    %247 = vmatpush1.xpose.msra.mxu0 0.0
    %248 = vmatprep.subr.mxu0 0.0
    %249 = vmatpush1.xpose.msra.mxu0 0.0
    %250 = vmatprep.subr.mxu0 0.0
    %251 = vmatpush1.xpose.msra.mxu0 0.0
    %252 = vmatprep.subr.mxu0 0.0
    %253 = vmatpush1.xpose.msra.mxu0 0.0
    %254 = vmatprep.subr.mxu0 0.0
    %255 = vmatpush1.xpose.msra.mxu0 0.0
    %256 = vmatprep.mubr.f32.mxu0 0.0
    %v257 = vand.u32 %v33, 4294901760
    %v258 = vsub.f32 %v33, %v257
    %259 = vmatmul.mubr.f32.gmra.mrb[0].mxu0 %v258
    %v260 = vpop.f32.mrb[0].mxu0
    %v261 = vadd.f32 %v187, %v260
    %v262 = vpop.f32.mrb[0].mxu0
    %263 = vdwg.mxu0
    %264 = vmatprep.subr.mxu0 0.0
    %v265 = vand.u32 %v36, 4294901760
    %266 = vmatpush1.xpose.msra.mxu0 %v265
    %267 = vmatprep.subr.mxu0 0.0
    %268 = vmatpush1.xpose.msra.mxu0 0.0
    %269 = vmatprep.subr.mxu0 0.0
    %270 = vmatpush1.xpose.msra.mxu0 0.0
    %271 = vmatprep.subr.mxu0 0.0
    %272 = vmatpush1.xpose.msra.mxu0 0.0
    %273 = vmatprep.subr.mxu0 0.0
    %274 = vmatpush1.xpose.msra.mxu0 0.0
    %275 = vmatprep.subr.mxu0 0.0
    %276 = vmatpush1.xpose.msra.mxu0 0.0
    %277 = vmatprep.subr.mxu0 0.0
    %278 = vmatpush1.xpose.msra.mxu0 0.0
    %279 = vmatprep.subr.mxu0 0.0
    %280 = vmatpush1.xpose.msra.mxu0 0.0
    %281 = vmatprep.subr.mxu0 0.0
    %282 = vmatpush1.xpose.msra.mxu0 0.0
    %283 = vmatprep.subr.mxu0 0.0
    %284 = vmatpush1.xpose.msra.mxu0 0.0
    %285 = vmatprep.subr.mxu0 0.0
    %286 = vmatpush1.xpose.msra.mxu0 0.0
    %287 = vmatprep.subr.mxu0 0.0
    %288 = vmatpush1.xpose.msra.mxu0 0.0
    %289 = vmatprep.subr.mxu0 0.0
    %290 = vmatpush1.xpose.msra.mxu0 0.0
    %291 = vmatprep.subr.mxu0 0.0
    %292 = vmatpush1.xpose.msra.mxu0 0.0
    %293 = vmatprep.subr.mxu0 0.0
    %294 = vmatpush1.xpose.msra.mxu0 0.0
    %295 = vmatprep.subr.mxu0 0.0
    %296 = vmatpush1.xpose.msra.mxu0 0.0
    %297 = vmatprep.subr.mxu0 0.0
    %298 = vmatpush1.xpose.msra.mxu0 0.0
    %299 = vmatprep.subr.mxu0 0.0
    %300 = vmatpush1.xpose.msra.mxu0 0.0
    %301 = vmatprep.subr.mxu0 0.0
    %302 = vmatpush1.xpose.msra.mxu0 0.0
    %303 = vmatprep.subr.mxu0 0.0
    %304 = vmatpush1.xpose.msra.mxu0 0.0
    %305 = vmatprep.subr.mxu0 0.0
    %306 = vmatpush1.xpose.msra.mxu0 0.0
    %307 = vmatprep.subr.mxu0 0.0
    %308 = vmatpush1.xpose.msra.mxu0 0.0
    %309 = vmatprep.subr.mxu0 0.0
    %310 = vmatpush1.xpose.msra.mxu0 0.0
    %311 = vmatprep.subr.mxu0 0.0
    %312 = vmatpush1.xpose.msra.mxu0 0.0
    %313 = vmatprep.subr.mxu0 0.0
    %314 = vmatpush1.xpose.msra.mxu0 0.0
    %315 = vmatprep.subr.mxu0 0.0
    %316 = vmatpush1.xpose.msra.mxu0 0.0
    %317 = vmatprep.subr.mxu0 0.0
    %318 = vmatpush1.xpose.msra.mxu0 0.0
    %319 = vmatprep.subr.mxu0 0.0
    %320 = vmatpush1.xpose.msra.mxu0 0.0
    %321 = vmatprep.subr.mxu0 0.0
    %322 = vmatpush1.xpose.msra.mxu0 0.0
    %323 = vmatprep.subr.mxu0 0.0
    %324 = vmatpush1.xpose.msra.mxu0 0.0
    %325 = vmatprep.subr.mxu0 0.0
    %326 = vmatpush1.xpose.msra.mxu0 0.0
    %327 = vmatprep.subr.mxu0 0.0
    %328 = vmatpush1.xpose.msra.mxu0 0.0
    %329 = vmatprep.mubr.f32.mxu0 0.0
    %v330 = vand.u32 %v33, 4294901760
    %v331 = vsub.f32 %v33, %v330
    %v332 = vand.u32 %v331, 4294901760
    %333 = vmatmul.mubr.f32.gmra.mrb[0].mxu0 %v332
    %v334 = vpop.f32.mrb[0].mxu0
    %v335 = vadd.f32 %v261, %v334
    %v336 = vpop.f32.mrb[0].mxu0
    %337 = vdwg.mxu0
    %338 = vmatprep.subr.mxu0 0.0
    %v339 = vand.u32 %v36, 4294901760
    %v340 = vsub.f32 %v36, %v339
    %v341 = vand.u32 %v340, 4294901760
    %342 = vmatpush1.xpose.msra.mxu0 %v341
    %343 = vmatprep.subr.mxu0 0.0
    %344 = vmatpush1.xpose.msra.mxu0 0.0
    %345 = vmatprep.subr.mxu0 0.0
    %346 = vmatpush1.xpose.msra.mxu0 0.0
    %347 = vmatprep.subr.mxu0 0.0
    %348 = vmatpush1.xpose.msra.mxu0 0.0
    %349 = vmatprep.subr.mxu0 0.0
    %350 = vmatpush1.xpose.msra.mxu0 0.0
    %351 = vmatprep.subr.mxu0 0.0
    %352 = vmatpush1.xpose.msra.mxu0 0.0
    %353 = vmatprep.subr.mxu0 0.0
    %354 = vmatpush1.xpose.msra.mxu0 0.0
    %355 = vmatprep.subr.mxu0 0.0
    %356 = vmatpush1.xpose.msra.mxu0 0.0
    %357 = vmatprep.subr.mxu0 0.0
    %358 = vmatpush1.xpose.msra.mxu0 0.0
    %359 = vmatprep.subr.mxu0 0.0
    %360 = vmatpush1.xpose.msra.mxu0 0.0
    %361 = vmatprep.subr.mxu0 0.0
    %362 = vmatpush1.xpose.msra.mxu0 0.0
    %363 = vmatprep.subr.mxu0 0.0
    %364 = vmatpush1.xpose.msra.mxu0 0.0
    %365 = vmatprep.subr.mxu0 0.0
    %366 = vmatpush1.xpose.msra.mxu0 0.0
    %367 = vmatprep.subr.mxu0 0.0
    %368 = vmatpush1.xpose.msra.mxu0 0.0
    %369 = vmatprep.subr.mxu0 0.0
    %370 = vmatpush1.xpose.msra.mxu0 0.0
    %371 = vmatprep.subr.mxu0 0.0
    %372 = vmatpush1.xpose.msra.mxu0 0.0
    %373 = vmatprep.subr.mxu0 0.0
    %374 = vmatpush1.xpose.msra.mxu0 0.0
    %375 = vmatprep.subr.mxu0 0.0
    %376 = vmatpush1.xpose.msra.mxu0 0.0
    %377 = vmatprep.subr.mxu0 0.0
    %378 = vmatpush1.xpose.msra.mxu0 0.0
    %379 = vmatprep.subr.mxu0 0.0
    %380 = vmatpush1.xpose.msra.mxu0 0.0
    %381 = vmatprep.subr.mxu0 0.0
    %382 = vmatpush1.xpose.msra.mxu0 0.0
    %383 = vmatprep.subr.mxu0 0.0
    %384 = vmatpush1.xpose.msra.mxu0 0.0
    %385 = vmatprep.subr.mxu0 0.0
    %386 = vmatpush1.xpose.msra.mxu0 0.0
    %387 = vmatprep.subr.mxu0 0.0
    %388 = vmatpush1.xpose.msra.mxu0 0.0
    %389 = vmatprep.subr.mxu0 0.0
    %390 = vmatpush1.xpose.msra.mxu0 0.0
    %391 = vmatprep.subr.mxu0 0.0
    %392 = vmatpush1.xpose.msra.mxu0 0.0
    %393 = vmatprep.subr.mxu0 0.0
    %394 = vmatpush1.xpose.msra.mxu0 0.0
    %395 = vmatprep.subr.mxu0 0.0
    %396 = vmatpush1.xpose.msra.mxu0 0.0
    %397 = vmatprep.subr.mxu0 0.0
    %398 = vmatpush1.xpose.msra.mxu0 0.0
    %399 = vmatprep.subr.mxu0 0.0
    %400 = vmatpush1.xpose.msra.mxu0 0.0
    %401 = vmatprep.subr.mxu0 0.0
    %402 = vmatpush1.xpose.msra.mxu0 0.0
    %403 = vmatprep.subr.mxu0 0.0
    %404 = vmatpush1.xpose.msra.mxu0 0.0
    %405 = vmatprep.mubr.f32.mxu0 0.0
    %v406 = vand.u32 %v33, 4294901760
    %407 = vmatmul.mubr.f32.gmra.mrb[0].mxu0 %v406
    %v408 = vpop.f32.mrb[0].mxu0
    %v409 = vadd.f32 %v335, %v408
    %v410 = vpop.f32.mrb[0].mxu0
    %411 = vdwg.mxu0
    %412 = vmatprep.subr.mxu0 0.0
    %v413 = vand.u32 %v36, 4294901760
    %414 = vmatpush1.xpose.msra.mxu0 %v413
    %415 = vmatprep.subr.mxu0 0.0
    %416 = vmatpush1.xpose.msra.mxu0 0.0
    %417 = vmatprep.subr.mxu0 0.0
    %418 = vmatpush1.xpose.msra.mxu0 0.0
    %419 = vmatprep.subr.mxu0 0.0
    %420 = vmatpush1.xpose.msra.mxu0 0.0
    %421 = vmatprep.subr.mxu0 0.0
    %422 = vmatpush1.xpose.msra.mxu0 0.0
    %423 = vmatprep.subr.mxu0 0.0
    %424 = vmatpush1.xpose.msra.mxu0 0.0
    %425 = vmatprep.subr.mxu0 0.0
    %426 = vmatpush1.xpose.msra.mxu0 0.0
    %427 = vmatprep.subr.mxu0 0.0
    %428 = vmatpush1.xpose.msra.mxu0 0.0
    %429 = vmatprep.subr.mxu0 0.0
    %430 = vmatpush1.xpose.msra.mxu0 0.0
    %431 = vmatprep.subr.mxu0 0.0
    %432 = vmatpush1.xpose.msra.mxu0 0.0
    %433 = vmatprep.subr.mxu0 0.0
    %434 = vmatpush1.xpose.msra.mxu0 0.0
    %435 = vmatprep.subr.mxu0 0.0
    %436 = vmatpush1.xpose.msra.mxu0 0.0
    %437 = vmatprep.subr.mxu0 0.0
    %438 = vmatpush1.xpose.msra.mxu0 0.0
    %439 = vmatprep.subr.mxu0 0.0
    %440 = vmatpush1.xpose.msra.mxu0 0.0
    %441 = vmatprep.subr.mxu0 0.0
    %442 = vmatpush1.xpose.msra.mxu0 0.0
    %443 = vmatprep.subr.mxu0 0.0
    %444 = vmatpush1.xpose.msra.mxu0 0.0
    %445 = vmatprep.subr.mxu0 0.0
    %446 = vmatpush1.xpose.msra.mxu0 0.0
    %447 = vmatprep.subr.mxu0 0.0
    %448 = vmatpush1.xpose.msra.mxu0 0.0
    %449 = vmatprep.subr.mxu0 0.0
    %450 = vmatpush1.xpose.msra.mxu0 0.0
    %451 = vmatprep.subr.mxu0 0.0
    %452 = vmatpush1.xpose.msra.mxu0 0.0
    %453 = vmatprep.subr.mxu0 0.0
    %454 = vmatpush1.xpose.msra.mxu0 0.0
    %455 = vmatprep.subr.mxu0 0.0
    %456 = vmatpush1.xpose.msra.mxu0 0.0
    %457 = vmatprep.subr.mxu0 0.0
    %458 = vmatpush1.xpose.msra.mxu0 0.0
    %459 = vmatprep.subr.mxu0 0.0
    %460 = vmatpush1.xpose.msra.mxu0 0.0
    %461 = vmatprep.subr.mxu0 0.0
    %462 = vmatpush1.xpose.msra.mxu0 0.0
    %463 = vmatprep.subr.mxu0 0.0
    %464 = vmatpush1.xpose.msra.mxu0 0.0
    %465 = vmatprep.subr.mxu0 0.0
    %466 = vmatpush1.xpose.msra.mxu0 0.0
    %467 = vmatprep.subr.mxu0 0.0
    %468 = vmatpush1.xpose.msra.mxu0 0.0
    %469 = vmatprep.subr.mxu0 0.0
    %470 = vmatpush1.xpose.msra.mxu0 0.0
    %471 = vmatprep.subr.mxu0 0.0
    %472 = vmatpush1.xpose.msra.mxu0 0.0
    %473 = vmatprep.subr.mxu0 0.0
    %474 = vmatpush1.xpose.msra.mxu0 0.0
    %475 = vmatprep.subr.mxu0 0.0
    %476 = vmatpush1.xpose.msra.mxu0 0.0
    %477 = vmatprep.mubr.f32.mxu0 0.0
    %v478 = vand.u32 %v33, 4294901760
    %479 = vmatmul.mubr.f32.gmra.mrb[0].mxu0 %v478
    %v480 = vpop.f32.mrb[0].mxu0
    %v481 = vadd.f32 %v409, %v480
    %v482 = vpop.f32.mrb[0].mxu0
    %483 = vdwg.mxu0
    %v484 = vmul.f32 %v28, %v28
    %v485 = vsel %vm31, %v484, 0.0
    %486 = vadd.xlane.f32.xlu0 %v485
    %v487 = vpop.xlane.xlu0 %486
    %v488 = vmul.f32 %v29, %v29
    %v490 = vsel %vm31, 1.0, 0
    %v493 = vsel %vm31, %v488, 0
    %495 = vmatprep.subr.mxu0 0.0
    %v496 = vand.u32 %v493, 4294901760
    %497 = vmatpush1.xpose.msra.mxu0 %v496
    %498 = vmatprep.subr.mxu0 0.0
    %499 = vmatpush1.xpose.msra.mxu0 0.0
    %500 = vmatprep.subr.mxu0 0.0
    %501 = vmatpush1.xpose.msra.mxu0 0.0
    %502 = vmatprep.subr.mxu0 0.0
    %503 = vmatpush1.xpose.msra.mxu0 0.0
    %504 = vmatprep.subr.mxu0 0.0
    %505 = vmatpush1.xpose.msra.mxu0 0.0
    %506 = vmatprep.subr.mxu0 0.0
    %507 = vmatpush1.xpose.msra.mxu0 0.0
    %508 = vmatprep.subr.mxu0 0.0
    %509 = vmatpush1.xpose.msra.mxu0 0.0
    %510 = vmatprep.subr.mxu0 0.0
    %511 = vmatpush1.xpose.msra.mxu0 0.0
    %512 = vmatprep.subr.mxu0 0.0
    %513 = vmatpush1.xpose.msra.mxu0 0.0
    %514 = vmatprep.subr.mxu0 0.0
    %515 = vmatpush1.xpose.msra.mxu0 0.0
    %516 = vmatprep.subr.mxu0 0.0
    %517 = vmatpush1.xpose.msra.mxu0 0.0
    %518 = vmatprep.subr.mxu0 0.0
    %519 = vmatpush1.xpose.msra.mxu0 0.0
    %520 = vmatprep.subr.mxu0 0.0
    %521 = vmatpush1.xpose.msra.mxu0 0.0
    %522 = vmatprep.subr.mxu0 0.0
    %523 = vmatpush1.xpose.msra.mxu0 0.0
    %524 = vmatprep.subr.mxu0 0.0
    %525 = vmatpush1.xpose.msra.mxu0 0.0
    %526 = vmatprep.subr.mxu0 0.0
    %527 = vmatpush1.xpose.msra.mxu0 0.0
    %528 = vmatprep.subr.mxu0 0.0
    %529 = vmatpush1.xpose.msra.mxu0 0.0
    %530 = vmatprep.subr.mxu0 0.0
    %531 = vmatpush1.xpose.msra.mxu0 0.0
    %532 = vmatprep.subr.mxu0 0.0
    %533 = vmatpush1.xpose.msra.mxu0 0.0
    %534 = vmatprep.subr.mxu0 0.0
    %535 = vmatpush1.xpose.msra.mxu0 0.0
    %536 = vmatprep.subr.mxu0 0.0
    %537 = vmatpush1.xpose.msra.mxu0 0.0
    %538 = vmatprep.subr.mxu0 0.0
    %539 = vmatpush1.xpose.msra.mxu0 0.0
    %540 = vmatprep.subr.mxu0 0.0
    %541 = vmatpush1.xpose.msra.mxu0 0.0
    %542 = vmatprep.subr.mxu0 0.0
    %543 = vmatpush1.xpose.msra.mxu0 0.0
    %544 = vmatprep.subr.mxu0 0.0
    %545 = vmatpush1.xpose.msra.mxu0 0.0
    %546 = vmatprep.subr.mxu0 0.0
    %547 = vmatpush1.xpose.msra.mxu0 0.0
    %548 = vmatprep.subr.mxu0 0.0
    %549 = vmatpush1.xpose.msra.mxu0 0.0
    %550 = vmatprep.subr.mxu0 0.0
    %551 = vmatpush1.xpose.msra.mxu0 0.0
    %552 = vmatprep.subr.mxu0 0.0
    %553 = vmatpush1.xpose.msra.mxu0 0.0
    %554 = vmatprep.subr.mxu0 0.0
    %555 = vmatpush1.xpose.msra.mxu0 0.0
    %556 = vmatprep.subr.mxu0 0.0
    %557 = vmatpush1.xpose.msra.mxu0 0.0
    %558 = vmatprep.subr.mxu0 0.0
    %559 = vmatpush1.xpose.msra.mxu0 0.0
    %560 = vmatprep.mubr.f32.mxu0 0.0
    %v561 = vand.u32 %v490, 4294901760
    %v562 = vsub.f32 %v490, %v561
    %v563 = vand.u32 %v562, 4294901760
    %v564 = vsub.f32 %v562, %v563
    %v565 = vand.u32 %v564, 4294901760
    %566 = vmatmul.mubr.f32.gmra.mrb[0].mxu0 %v565
    %v567 = vpop.f32.mrb[0].mxu0
    %v568 = vadd.f32 0.0, %v567
    %v569 = vpop.f32.mrb[0].mxu0
    %570 = vdwg.mxu0
    %571 = vmatprep.subr.mxu0 0.0
    %v572 = vand.u32 %v493, 4294901760
    %v573 = vsub.f32 %v493, %v572
    %v574 = vand.u32 %v573, 4294901760
    %v575 = vsub.f32 %v573, %v574
    %v576 = vand.u32 %v575, 4294901760
    %577 = vmatpush1.xpose.msra.mxu0 %v576
    %578 = vmatprep.subr.mxu0 0.0
    %579 = vmatpush1.xpose.msra.mxu0 0.0
    %580 = vmatprep.subr.mxu0 0.0
    %581 = vmatpush1.xpose.msra.mxu0 0.0
    %582 = vmatprep.subr.mxu0 0.0
    %583 = vmatpush1.xpose.msra.mxu0 0.0
    %584 = vmatprep.subr.mxu0 0.0
    %585 = vmatpush1.xpose.msra.mxu0 0.0
    %586 = vmatprep.subr.mxu0 0.0
    %587 = vmatpush1.xpose.msra.mxu0 0.0
    %588 = vmatprep.subr.mxu0 0.0
    %589 = vmatpush1.xpose.msra.mxu0 0.0
    %590 = vmatprep.subr.mxu0 0.0
    %591 = vmatpush1.xpose.msra.mxu0 0.0
    %592 = vmatprep.subr.mxu0 0.0
    %593 = vmatpush1.xpose.msra.mxu0 0.0
    %594 = vmatprep.subr.mxu0 0.0
    %595 = vmatpush1.xpose.msra.mxu0 0.0
    %596 = vmatprep.subr.mxu0 0.0
    %597 = vmatpush1.xpose.msra.mxu0 0.0
    %598 = vmatprep.subr.mxu0 0.0
    %599 = vmatpush1.xpose.msra.mxu0 0.0
    %600 = vmatprep.subr.mxu0 0.0
    %601 = vmatpush1.xpose.msra.mxu0 0.0
    %602 = vmatprep.subr.mxu0 0.0
    %603 = vmatpush1.xpose.msra.mxu0 0.0
    %604 = vmatprep.subr.mxu0 0.0
    %605 = vmatpush1.xpose.msra.mxu0 0.0
    %606 = vmatprep.subr.mxu0 0.0
    %607 = vmatpush1.xpose.msra.mxu0 0.0
    %608 = vmatprep.subr.mxu0 0.0
    %609 = vmatpush1.xpose.msra.mxu0 0.0
    %610 = vmatprep.subr.mxu0 0.0
    %611 = vmatpush1.xpose.msra.mxu0 0.0
    %612 = vmatprep.subr.mxu0 0.0
    %613 = vmatpush1.xpose.msra.mxu0 0.0
    %614 = vmatprep.subr.mxu0 0.0
    %615 = vmatpush1.xpose.msra.mxu0 0.0
    %616 = vmatprep.subr.mxu0 0.0
    %617 = vmatpush1.xpose.msra.mxu0 0.0
    %618 = vmatprep.subr.mxu0 0.0
    %619 = vmatpush1.xpose.msra.mxu0 0.0
    %620 = vmatprep.subr.mxu0 0.0
    %621 = vmatpush1.xpose.msra.mxu0 0.0
    %622 = vmatprep.subr.mxu0 0.0
    %623 = vmatpush1.xpose.msra.mxu0 0.0
    %624 = vmatprep.subr.mxu0 0.0
    %625 = vmatpush1.xpose.msra.mxu0 0.0
    %626 = vmatprep.subr.mxu0 0.0
    %627 = vmatpush1.xpose.msra.mxu0 0.0
    %628 = vmatprep.subr.mxu0 0.0
    %629 = vmatpush1.xpose.msra.mxu0 0.0
    %630 = vmatprep.subr.mxu0 0.0
    %631 = vmatpush1.xpose.msra.mxu0 0.0
    %632 = vmatprep.subr.mxu0 0.0
    %633 = vmatpush1.xpose.msra.mxu0 0.0
    %634 = vmatprep.subr.mxu0 0.0
    %635 = vmatpush1.xpose.msra.mxu0 0.0
    %636 = vmatprep.subr.mxu0 0.0
    %637 = vmatpush1.xpose.msra.mxu0 0.0
    %638 = vmatprep.subr.mxu0 0.0
    %639 = vmatpush1.xpose.msra.mxu0 0.0
    %640 = vmatprep.mubr.f32.mxu0 0.0
    %v641 = vand.u32 %v490, 4294901760
    %642 = vmatmul.mubr.f32.gmra.mrb[0].mxu0 %v641
    %v643 = vpop.f32.mrb[0].mxu0
    %v644 = vadd.f32 %v568, %v643
    %v645 = vpop.f32.mrb[0].mxu0
    %646 = vdwg.mxu0
    %647 = vmatprep.subr.mxu0 0.0
    %v648 = vand.u32 %v493, 4294901760
    %v649 = vsub.f32 %v493, %v648
    %650 = vmatpush1.xpose.msra.mxu0 %v649
    %651 = vmatprep.subr.mxu0 0.0
    %652 = vmatpush1.xpose.msra.mxu0 0.0
    %653 = vmatprep.subr.mxu0 0.0
    %654 = vmatpush1.xpose.msra.mxu0 0.0
    %655 = vmatprep.subr.mxu0 0.0
    %656 = vmatpush1.xpose.msra.mxu0 0.0
    %657 = vmatprep.subr.mxu0 0.0
    %658 = vmatpush1.xpose.msra.mxu0 0.0
    %659 = vmatprep.subr.mxu0 0.0
    %660 = vmatpush1.xpose.msra.mxu0 0.0
    %661 = vmatprep.subr.mxu0 0.0
    %662 = vmatpush1.xpose.msra.mxu0 0.0
    %663 = vmatprep.subr.mxu0 0.0
    %664 = vmatpush1.xpose.msra.mxu0 0.0
    %665 = vmatprep.subr.mxu0 0.0
    %666 = vmatpush1.xpose.msra.mxu0 0.0
    %667 = vmatprep.subr.mxu0 0.0
    %668 = vmatpush1.xpose.msra.mxu0 0.0
    %669 = vmatprep.subr.mxu0 0.0
    %670 = vmatpush1.xpose.msra.mxu0 0.0
    %671 = vmatprep.subr.mxu0 0.0
    %672 = vmatpush1.xpose.msra.mxu0 0.0
    %673 = vmatprep.subr.mxu0 0.0
    %674 = vmatpush1.xpose.msra.mxu0 0.0
    %675 = vmatprep.subr.mxu0 0.0
    %676 = vmatpush1.xpose.msra.mxu0 0.0
    %677 = vmatprep.subr.mxu0 0.0
    %678 = vmatpush1.xpose.msra.mxu0 0.0
    %679 = vmatprep.subr.mxu0 0.0
    %680 = vmatpush1.xpose.msra.mxu0 0.0
    %681 = vmatprep.subr.mxu0 0.0
    %682 = vmatpush1.xpose.msra.mxu0 0.0
    %683 = vmatprep.subr.mxu0 0.0
    %684 = vmatpush1.xpose.msra.mxu0 0.0
    %685 = vmatprep.subr.mxu0 0.0
    %686 = vmatpush1.xpose.msra.mxu0 0.0
    %687 = vmatprep.subr.mxu0 0.0
    %688 = vmatpush1.xpose.msra.mxu0 0.0
    %689 = vmatprep.subr.mxu0 0.0
    %690 = vmatpush1.xpose.msra.mxu0 0.0
    %691 = vmatprep.subr.mxu0 0.0
    %692 = vmatpush1.xpose.msra.mxu0 0.0
    %693 = vmatprep.subr.mxu0 0.0
    %694 = vmatpush1.xpose.msra.mxu0 0.0
    %695 = vmatprep.subr.mxu0 0.0
    %696 = vmatpush1.xpose.msra.mxu0 0.0
    %697 = vmatprep.subr.mxu0 0.0
    %698 = vmatpush1.xpose.msra.mxu0 0.0
    %699 = vmatprep.subr.mxu0 0.0
    %700 = vmatpush1.xpose.msra.mxu0 0.0
    %701 = vmatprep.subr.mxu0 0.0
    %702 = vmatpush1.xpose.msra.mxu0 0.0
    %703 = vmatprep.subr.mxu0 0.0
    %704 = vmatpush1.xpose.msra.mxu0 0.0
    %705 = vmatprep.subr.mxu0 0.0
    %706 = vmatpush1.xpose.msra.mxu0 0.0
    %707 = vmatprep.subr.mxu0 0.0
    %708 = vmatpush1.xpose.msra.mxu0 0.0
    %709 = vmatprep.subr.mxu0 0.0
    %710 = vmatpush1.xpose.msra.mxu0 0.0
    %711 = vmatprep.subr.mxu0 0.0
    %712 = vmatpush1.xpose.msra.mxu0 0.0
    %713 = vmatprep.mubr.f32.mxu0 0.0
    %v714 = vand.u32 %v490, 4294901760
    %v715 = vsub.f32 %v490, %v714
    %716 = vmatmul.mubr.f32.gmra.mrb[0].mxu0 %v715
    %v717 = vpop.f32.mrb[0].mxu0
    %v718 = vadd.f32 %v644, %v717
    %v719 = vpop.f32.mrb[0].mxu0
    %720 = vdwg.mxu0
    %721 = vmatprep.subr.mxu0 0.0
    %v722 = vand.u32 %v493, 4294901760
    %723 = vmatpush1.xpose.msra.mxu0 %v722
    %724 = vmatprep.subr.mxu0 0.0
    %725 = vmatpush1.xpose.msra.mxu0 0.0
    %726 = vmatprep.subr.mxu0 0.0
    %727 = vmatpush1.xpose.msra.mxu0 0.0
    %728 = vmatprep.subr.mxu0 0.0
    %729 = vmatpush1.xpose.msra.mxu0 0.0
    %730 = vmatprep.subr.mxu0 0.0
    %731 = vmatpush1.xpose.msra.mxu0 0.0
    %732 = vmatprep.subr.mxu0 0.0
    %733 = vmatpush1.xpose.msra.mxu0 0.0
    %734 = vmatprep.subr.mxu0 0.0
    %735 = vmatpush1.xpose.msra.mxu0 0.0
    %736 = vmatprep.subr.mxu0 0.0
    %737 = vmatpush1.xpose.msra.mxu0 0.0
    %738 = vmatprep.subr.mxu0 0.0
    %739 = vmatpush1.xpose.msra.mxu0 0.0
    %740 = vmatprep.subr.mxu0 0.0
    %741 = vmatpush1.xpose.msra.mxu0 0.0
    %742 = vmatprep.subr.mxu0 0.0
    %743 = vmatpush1.xpose.msra.mxu0 0.0
    %744 = vmatprep.subr.mxu0 0.0
    %745 = vmatpush1.xpose.msra.mxu0 0.0
    %746 = vmatprep.subr.mxu0 0.0
    %747 = vmatpush1.xpose.msra.mxu0 0.0
    %748 = vmatprep.subr.mxu0 0.0
    %749 = vmatpush1.xpose.msra.mxu0 0.0
    %750 = vmatprep.subr.mxu0 0.0
    %751 = vmatpush1.xpose.msra.mxu0 0.0
    %752 = vmatprep.subr.mxu0 0.0
    %753 = vmatpush1.xpose.msra.mxu0 0.0
    %754 = vmatprep.subr.mxu0 0.0
    %755 = vmatpush1.xpose.msra.mxu0 0.0
    %756 = vmatprep.subr.mxu0 0.0
    %757 = vmatpush1.xpose.msra.mxu0 0.0
    %758 = vmatprep.subr.mxu0 0.0
    %759 = vmatpush1.xpose.msra.mxu0 0.0
    %760 = vmatprep.subr.mxu0 0.0
    %761 = vmatpush1.xpose.msra.mxu0 0.0
    %762 = vmatprep.subr.mxu0 0.0
    %763 = vmatpush1.xpose.msra.mxu0 0.0
    %764 = vmatprep.subr.mxu0 0.0
    %765 = vmatpush1.xpose.msra.mxu0 0.0
    %766 = vmatprep.subr.mxu0 0.0
    %767 = vmatpush1.xpose.msra.mxu0 0.0
    %768 = vmatprep.subr.mxu0 0.0
    %769 = vmatpush1.xpose.msra.mxu0 0.0
    %770 = vmatprep.subr.mxu0 0.0
    %771 = vmatpush1.xpose.msra.mxu0 0.0
    %772 = vmatprep.subr.mxu0 0.0
    %773 = vmatpush1.xpose.msra.mxu0 0.0
    %774 = vmatprep.subr.mxu0 0.0
    %775 = vmatpush1.xpose.msra.mxu0 0.0
    %776 = vmatprep.subr.mxu0 0.0
    %777 = vmatpush1.xpose.msra.mxu0 0.0
    %778 = vmatprep.subr.mxu0 0.0
    %779 = vmatpush1.xpose.msra.mxu0 0.0
    %780 = vmatprep.subr.mxu0 0.0
    %781 = vmatpush1.xpose.msra.mxu0 0.0
    %782 = vmatprep.subr.mxu0 0.0
    %783 = vmatpush1.xpose.msra.mxu0 0.0
    %784 = vmatprep.subr.mxu0 0.0
    %785 = vmatpush1.xpose.msra.mxu0 0.0
    %786 = vmatprep.mubr.f32.mxu0 0.0
    %v787 = vand.u32 %v490, 4294901760
    %v788 = vsub.f32 %v490, %v787
    %v789 = vand.u32 %v788, 4294901760
    %790 = vmatmul.mubr.f32.gmra.mrb[0].mxu0 %v789
    %v791 = vpop.f32.mrb[0].mxu0
    %v792 = vadd.f32 %v718, %v791
    %v793 = vpop.f32.mrb[0].mxu0
    %794 = vdwg.mxu0
    %795 = vmatprep.subr.mxu0 0.0
    %v796 = vand.u32 %v493, 4294901760
    %v797 = vsub.f32 %v493, %v796
    %v798 = vand.u32 %v797, 4294901760
    %799 = vmatpush1.xpose.msra.mxu0 %v798
    %800 = vmatprep.subr.mxu0 0.0
    %801 = vmatpush1.xpose.msra.mxu0 0.0
    %802 = vmatprep.subr.mxu0 0.0
    %803 = vmatpush1.xpose.msra.mxu0 0.0
    %804 = vmatprep.subr.mxu0 0.0
    %805 = vmatpush1.xpose.msra.mxu0 0.0
    %806 = vmatprep.subr.mxu0 0.0
    %807 = vmatpush1.xpose.msra.mxu0 0.0
    %808 = vmatprep.subr.mxu0 0.0
    %809 = vmatpush1.xpose.msra.mxu0 0.0
    %810 = vmatprep.subr.mxu0 0.0
    %811 = vmatpush1.xpose.msra.mxu0 0.0
    %812 = vmatprep.subr.mxu0 0.0
    %813 = vmatpush1.xpose.msra.mxu0 0.0
    %814 = vmatprep.subr.mxu0 0.0
    %815 = vmatpush1.xpose.msra.mxu0 0.0
    %816 = vmatprep.subr.mxu0 0.0
    %817 = vmatpush1.xpose.msra.mxu0 0.0
    %818 = vmatprep.subr.mxu0 0.0
    %819 = vmatpush1.xpose.msra.mxu0 0.0
    %820 = vmatprep.subr.mxu0 0.0
    %821 = vmatpush1.xpose.msra.mxu0 0.0
    %822 = vmatprep.subr.mxu0 0.0
    %823 = vmatpush1.xpose.msra.mxu0 0.0
    %824 = vmatprep.subr.mxu0 0.0
    %825 = vmatpush1.xpose.msra.mxu0 0.0
    %826 = vmatprep.subr.mxu0 0.0
    %827 = vmatpush1.xpose.msra.mxu0 0.0
    %828 = vmatprep.subr.mxu0 0.0
    %829 = vmatpush1.xpose.msra.mxu0 0.0
    %830 = vmatprep.subr.mxu0 0.0
    %831 = vmatpush1.xpose.msra.mxu0 0.0
    %832 = vmatprep.subr.mxu0 0.0
    %833 = vmatpush1.xpose.msra.mxu0 0.0
    %834 = vmatprep.subr.mxu0 0.0
    %835 = vmatpush1.xpose.msra.mxu0 0.0
    %836 = vmatprep.subr.mxu0 0.0
    %837 = vmatpush1.xpose.msra.mxu0 0.0
    %838 = vmatprep.subr.mxu0 0.0
    %839 = vmatpush1.xpose.msra.mxu0 0.0
    %840 = vmatprep.subr.mxu0 0.0
    %841 = vmatpush1.xpose.msra.mxu0 0.0
    %842 = vmatprep.subr.mxu0 0.0
    %843 = vmatpush1.xpose.msra.mxu0 0.0
    %844 = vmatprep.subr.mxu0 0.0
    %845 = vmatpush1.xpose.msra.mxu0 0.0
    %846 = vmatprep.subr.mxu0 0.0
    %847 = vmatpush1.xpose.msra.mxu0 0.0
    %848 = vmatprep.subr.mxu0 0.0
    %849 = vmatpush1.xpose.msra.mxu0 0.0
    %850 = vmatprep.subr.mxu0 0.0
    %851 = vmatpush1.xpose.msra.mxu0 0.0
    %852 = vmatprep.subr.mxu0 0.0
    %853 = vmatpush1.xpose.msra.mxu0 0.0
    %854 = vmatprep.subr.mxu0 0.0
    %855 = vmatpush1.xpose.msra.mxu0 0.0
    %856 = vmatprep.subr.mxu0 0.0
    %857 = vmatpush1.xpose.msra.mxu0 0.0
    %858 = vmatprep.subr.mxu0 0.0
    %859 = vmatpush1.xpose.msra.mxu0 0.0
    %860 = vmatprep.subr.mxu0 0.0
    %861 = vmatpush1.xpose.msra.mxu0 0.0
    %862 = vmatprep.mubr.f32.mxu0 0.0
    %v863 = vand.u32 %v490, 4294901760
    %864 = vmatmul.mubr.f32.gmra.mrb[0].mxu0 %v863
    %v865 = vpop.f32.mrb[0].mxu0
    %v866 = vadd.f32 %v792, %v865
    %v867 = vpop.f32.mrb[0].mxu0
    %868 = vdwg.mxu0
    %869 = vmatprep.subr.mxu0 0.0
    %v870 = vand.u32 %v493, 4294901760
    %871 = vmatpush1.xpose.msra.mxu0 %v870
    %872 = vmatprep.subr.mxu0 0.0
    %873 = vmatpush1.xpose.msra.mxu0 0.0
    %874 = vmatprep.subr.mxu0 0.0
    %875 = vmatpush1.xpose.msra.mxu0 0.0
    %876 = vmatprep.subr.mxu0 0.0
    %877 = vmatpush1.xpose.msra.mxu0 0.0
    %878 = vmatprep.subr.mxu0 0.0
    %879 = vmatpush1.xpose.msra.mxu0 0.0
    %880 = vmatprep.subr.mxu0 0.0
    %881 = vmatpush1.xpose.msra.mxu0 0.0
    %882 = vmatprep.subr.mxu0 0.0
    %883 = vmatpush1.xpose.msra.mxu0 0.0
    %884 = vmatprep.subr.mxu0 0.0
    %885 = vmatpush1.xpose.msra.mxu0 0.0
    %886 = vmatprep.subr.mxu0 0.0
    %887 = vmatpush1.xpose.msra.mxu0 0.0
    %888 = vmatprep.subr.mxu0 0.0
    %889 = vmatpush1.xpose.msra.mxu0 0.0
    %890 = vmatprep.subr.mxu0 0.0
    %891 = vmatpush1.xpose.msra.mxu0 0.0
    %892 = vmatprep.subr.mxu0 0.0
    %893 = vmatpush1.xpose.msra.mxu0 0.0
    %894 = vmatprep.subr.mxu0 0.0
    %895 = vmatpush1.xpose.msra.mxu0 0.0
    %896 = vmatprep.subr.mxu0 0.0
    %897 = vmatpush1.xpose.msra.mxu0 0.0
    %898 = vmatprep.subr.mxu0 0.0
    %899 = vmatpush1.xpose.msra.mxu0 0.0
    %900 = vmatprep.subr.mxu0 0.0
    %901 = vmatpush1.xpose.msra.mxu0 0.0
    %902 = vmatprep.subr.mxu0 0.0
    %903 = vmatpush1.xpose.msra.mxu0 0.0
    %904 = vmatprep.subr.mxu0 0.0
    %905 = vmatpush1.xpose.msra.mxu0 0.0
    %906 = vmatprep.subr.mxu0 0.0
    %907 = vmatpush1.xpose.msra.mxu0 0.0
    %908 = vmatprep.subr.mxu0 0.0
    %909 = vmatpush1.xpose.msra.mxu0 0.0
    %910 = vmatprep.subr.mxu0 0.0
    %911 = vmatpush1.xpose.msra.mxu0 0.0
    %912 = vmatprep.subr.mxu0 0.0
    %913 = vmatpush1.xpose.msra.mxu0 0.0
    %914 = vmatprep.subr.mxu0 0.0
    %915 = vmatpush1.xpose.msra.mxu0 0.0
    %916 = vmatprep.subr.mxu0 0.0
    %917 = vmatpush1.xpose.msra.mxu0 0.0
    %918 = vmatprep.subr.mxu0 0.0
    %919 = vmatpush1.xpose.msra.mxu0 0.0
    %920 = vmatprep.subr.mxu0 0.0
    %921 = vmatpush1.xpose.msra.mxu0 0.0
    %922 = vmatprep.subr.mxu0 0.0
    %923 = vmatpush1.xpose.msra.mxu0 0.0
    %924 = vmatprep.subr.mxu0 0.0
    %925 = vmatpush1.xpose.msra.mxu0 0.0
    %926 = vmatprep.subr.mxu0 0.0
    %927 = vmatpush1.xpose.msra.mxu0 0.0
    %928 = vmatprep.subr.mxu0 0.0
    %929 = vmatpush1.xpose.msra.mxu0 0.0
    %930 = vmatprep.subr.mxu0 0.0
    %931 = vmatpush1.xpose.msra.mxu0 0.0
    %932 = vmatprep.subr.mxu0 0.0
    %933 = vmatpush1.xpose.msra.mxu0 0.0
    %934 = vmatprep.mubr.f32.mxu0 0.0
    %v935 = vand.u32 %v490, 4294901760
    %936 = vmatmul.mubr.f32.gmra.mrb[0].mxu0 %v935
    %v937 = vpop.f32.mrb[0].mxu0
    %v938 = vadd.f32 %v866, %v937
    %v939 = vpop.f32.mrb[0].mxu0
    %940 = vdwg.mxu0
    %v941 = vlaneseq
    %v942 = vshrl.u32 %v941, 7
    %v943 = vsub.s32 0, %v942
    %v944 = vrot.slane %v938, %v943
    %v945 = vadd.f32 %v487, %v944
    %v946 = vmul.f32 %v481, 2.0
    %v947 = vsub.f32 %v945, %v946
    %v948 = vmax.f32 %v947, 0.0
    %v949 = vlaneseq
    %v950 = vshrl.u32 %v949, 7
    %v951 = vstv %s30
    %v952 = vadd.s32 %v950, %v951
    %v953 = vlaneseq
    %v954 = vand.u32 %v953, 127
    %vm955 = vcmp.eq.s32.totalorder %v952, %v954
    %v956 = vsel %vm955, 0.0, %v948
    %v957 = vmax.f32 %v956, 1e-12
    %v958 = vrsqrt.pop %v957
    %v959 = vmul.f32 %v957, %v958
    %vm960 = vcmp.eq.f32.partialorder %v957, inf
    %v961 = vsel %vm960, %v957, %v959
    %vm962 = vcmp.eq.f32.partialorder %v957, 0.0
    %v963 = vand.u32 %v957, 2147483648
    %v964 = vsel %vm962, %v963, %v961
    %v965 = vsub.f32 0.0, %v964
    %v966 = vmul.f32 %v965, 1.442695
    %v967 = vpow.pop %v966
    %v968 = vmul.f32 %v967, 1.442695
    %v969 = vpow.pop %v968
    %vm970 = vcmask 64512
    %v971 = vsel %vm970, %v969, 0.0
    %972 = vadd.xlane.f32.xlu0 %v971
    %v973 = vpop.xlane.xlu0 %972
    %v974 = vrcp.pop %v973
    %v975 = vmul.f32 %v969, %v974
    %v976 = vld [vmem:[#allocation2] sm:$0x1]
    %v977 = vsel %vm970, %v975, 0.0
    %v978 = vrot.slane %v977, 4
    %v979 = vadd.f32 %v977, %v978
    %v980 = vrot.slane %v979, 2
    %v981 = vadd.f32 %v979, %v980
    %v982 = vrot.slane %v981, 1
    %v983 = vadd.f32 %v981, %v982
    %v984 = vadd.f32 %v976, %v983
    %vm985 = vcmask 57344
    %986 = vst.msk [vmem:[#allocation2] sm:$0x1] %vm985, %v984
    %v987 = vld [vmem:[%s2] sm:$0xff]
    %v988 = vld [vmem:[%s2 + $0x8] sm:$0xff]
    %v989 = vld [vmem:[%s2 + $0x10] sm:$0xff]
    %v990 = vld [vmem:[%s2 + $0x18] sm:$0xff]
    %v992 = vsel %vm31, %v987, 0
    %v995 = vsel %vm31, %v988, 0
    %v998 = vsel %vm31, %v989, 0
    %v1001 = vsel %vm31, %v990, 0
    %1003 = vmatprep.subr.mxu0 0.0
    %v1004 = vand.u32 %v33, 4294901760
    %1005 = vmatpush1.xpose.msra.mxu0 %v1004
    %1006 = vmatprep.subr.mxu0 0.0
    %1007 = vmatpush1.xpose.msra.mxu0 0.0
    %1008 = vmatprep.subr.mxu0 0.0
    %1009 = vmatpush1.xpose.msra.mxu0 0.0
    %1010 = vmatprep.subr.mxu0 0.0
    %1011 = vmatpush1.xpose.msra.mxu0 0.0
    %1012 = vmatprep.subr.mxu0 0.0
    %1013 = vmatpush1.xpose.msra.mxu0 0.0
    %1014 = vmatprep.subr.mxu0 0.0
    %1015 = vmatpush1.xpose.msra.mxu0 0.0
    %1016 = vmatprep.subr.mxu0 0.0
    %1017 = vmatpush1.xpose.msra.mxu0 0.0
    %1018 = vmatprep.subr.mxu0 0.0
    %1019 = vmatpush1.xpose.msra.mxu0 0.0
    %1020 = vmatprep.subr.mxu0 0.0
    %1021 = vmatpush1.xpose.msra.mxu0 0.0
    %1022 = vmatprep.subr.mxu0 0.0
    %1023 = vmatpush1.xpose.msra.mxu0 0.0
    %1024 = vmatprep.subr.mxu0 0.0
    %1025 = vmatpush1.xpose.msra.mxu0 0.0
    %1026 = vmatprep.subr.mxu0 0.0
    %1027 = vmatpush1.xpose.msra.mxu0 0.0
    %1028 = vmatprep.subr.mxu0 0.0
    %1029 = vmatpush1.xpose.msra.mxu0 0.0
    %1030 = vmatprep.subr.mxu0 0.0
    %1031 = vmatpush1.xpose.msra.mxu0 0.0
    %1032 = vmatprep.subr.mxu0 0.0
    %1033 = vmatpush1.xpose.msra.mxu0 0.0
    %1034 = vmatprep.subr.mxu0 0.0
    %1035 = vmatpush1.xpose.msra.mxu0 0.0
    %1036 = vmatprep.subr.mxu0 0.0
    %1037 = vmatpush1.xpose.msra.mxu0 0.0
    %1038 = vmatprep.subr.mxu0 0.0
    %1039 = vmatpush1.xpose.msra.mxu0 0.0
    %1040 = vmatprep.subr.mxu0 0.0
    %1041 = vmatpush1.xpose.msra.mxu0 0.0
    %1042 = vmatprep.subr.mxu0 0.0
    %1043 = vmatpush1.xpose.msra.mxu0 0.0
    %1044 = vmatprep.subr.mxu0 0.0
    %1045 = vmatpush1.xpose.msra.mxu0 0.0
    %1046 = vmatprep.subr.mxu0 0.0
    %1047 = vmatpush1.xpose.msra.mxu0 0.0
    %1048 = vmatprep.subr.mxu0 0.0
    %1049 = vmatpush1.xpose.msra.mxu0 0.0
    %1050 = vmatprep.subr.mxu0 0.0
    %1051 = vmatpush1.xpose.msra.mxu0 0.0
    %1052 = vmatprep.subr.mxu0 0.0
    %1053 = vmatpush1.xpose.msra.mxu0 0.0
    %1054 = vmatprep.subr.mxu0 0.0
    %1055 = vmatpush1.xpose.msra.mxu0 0.0
    %1056 = vmatprep.subr.mxu0 0.0
    %1057 = vmatpush1.xpose.msra.mxu0 0.0
    %1058 = vmatprep.subr.mxu0 0.0
    %1059 = vmatpush1.xpose.msra.mxu0 0.0
    %1060 = vmatprep.subr.mxu0 0.0
    %1061 = vmatpush1.xpose.msra.mxu0 0.0
    %1062 = vmatprep.subr.mxu0 0.0
    %1063 = vmatpush1.xpose.msra.mxu0 0.0
    %1064 = vmatprep.subr.mxu0 0.0
    %1065 = vmatpush1.xpose.msra.mxu0 0.0
    %1066 = vmatprep.subr.mxu0 0.0
    %1067 = vmatpush1.xpose.msra.mxu0 0.0
    %1068 = vmatprep.mubr.f32.mxu0 0.0
    %v1069 = vand.u32 %v992, 4294901760
    %v1070 = vsub.f32 %v992, %v1069
    %v1071 = vand.u32 %v1070, 4294901760
    %v1072 = vsub.f32 %v1070, %v1071
    %v1073 = vand.u32 %v1072, 4294901760
    %1074 = vmatmul.mubr.f32.gmra.mrb[0].mxu0 %v1073
    %v1075 = vpop.f32.mrb[0].mxu0
    %v1076 = vadd.f32 0.0, %v1075
    %v1077 = vpop.f32.mrb[0].mxu0
    %1078 = vmatprep.mubr.f32.mxu0 0.0
    %v1079 = vand.u32 %v995, 4294901760
    %v1080 = vsub.f32 %v995, %v1079
    %v1081 = vand.u32 %v1080, 4294901760
    %v1082 = vsub.f32 %v1080, %v1081
    %v1083 = vand.u32 %v1082, 4294901760
    %1084 = vmatmul.mubr.f32.gmra.mrb[0].mxu0 %v1083
    %v1085 = vpop.f32.mrb[0].mxu0
    %v1086 = vadd.f32 0.0, %v1085
    %v1087 = vpop.f32.mrb[0].mxu0
    %1088 = vmatprep.mubr.f32.mxu0 0.0
    %v1089 = vand.u32 %v998, 4294901760
    %v1090 = vsub.f32 %v998, %v1089
    %v1091 = vand.u32 %v1090, 4294901760
    %v1092 = vsub.f32 %v1090, %v1091
    %v1093 = vand.u32 %v1092, 4294901760
    %1094 = vmatmul.mubr.f32.gmra.mrb[0].mxu0 %v1093
    %v1095 = vpop.f32.mrb[0].mxu0
    %v1096 = vadd.f32 0.0, %v1095
    %v1097 = vpop.f32.mrb[0].mxu0
    %1098 = vmatprep.mubr.f32.mxu0 0.0
    %v1099 = vand.u32 %v1001, 4294901760
    %v1100 = vsub.f32 %v1001, %v1099
    %v1101 = vand.u32 %v1100, 4294901760
    %v1102 = vsub.f32 %v1100, %v1101
    %v1103 = vand.u32 %v1102, 4294901760
    %1104 = vmatmul.mubr.f32.gmra.mrb[0].mxu0 %v1103
    %v1105 = vpop.f32.mrb[0].mxu0
    %v1106 = vadd.f32 0.0, %v1105
    %v1107 = vpop.f32.mrb[0].mxu0
    %1108 = vdwg.mxu0
    %1109 = vmatprep.subr.mxu0 0.0
    %v1110 = vand.u32 %v33, 4294901760
    %v1111 = vsub.f32 %v33, %v1110
    %v1112 = vand.u32 %v1111, 4294901760
    %v1113 = vsub.f32 %v1111, %v1112
    %v1114 = vand.u32 %v1113, 4294901760
    %1115 = vmatpush1.xpose.msra.mxu0 %v1114
    %1116 = vmatprep.subr.mxu0 0.0
    %1117 = vmatpush1.xpose.msra.mxu0 0.0
    %1118 = vmatprep.subr.mxu0 0.0
    %1119 = vmatpush1.xpose.msra.mxu0 0.0
    %1120 = vmatprep.subr.mxu0 0.0
    %1121 = vmatpush1.xpose.msra.mxu0 0.0
    %1122 = vmatprep.subr.mxu0 0.0
    %1123 = vmatpush1.xpose.msra.mxu0 0.0
    %1124 = vmatprep.subr.mxu0 0.0
    %1125 = vmatpush1.xpose.msra.mxu0 0.0
    %1126 = vmatprep.subr.mxu0 0.0
    %1127 = vmatpush1.xpose.msra.mxu0 0.0
    %1128 = vmatprep.subr.mxu0 0.0
    %1129 = vmatpush1.xpose.msra.mxu0 0.0
    %1130 = vmatprep.subr.mxu0 0.0
    %1131 = vmatpush1.xpose.msra.mxu0 0.0
    %1132 = vmatprep.subr.mxu0 0.0
    %1133 = vmatpush1.xpose.msra.mxu0 0.0
    %1134 = vmatprep.subr.mxu0 0.0
    %1135 = vmatpush1.xpose.msra.mxu0 0.0
    %1136 = vmatprep.subr.mxu0 0.0
    %1137 = vmatpush1.xpose.msra.mxu0 0.0
    %1138 = vmatprep.subr.mxu0 0.0
    %1139 = vmatpush1.xpose.msra.mxu0 0.0
    %1140 = vmatprep.subr.mxu0 0.0
    %1141 = vmatpush1.xpose.msra.mxu0 0.0
    %1142 = vmatprep.subr.mxu0 0.0
    %1143 = vmatpush1.xpose.msra.mxu0 0.0
    %1144 = vmatprep.subr.mxu0 0.0
    %1145 = vmatpush1.xpose.msra.mxu0 0.0
    %1146 = vmatprep.subr.mxu0 0.0
    %1147 = vmatpush1.xpose.msra.mxu0 0.0
    %1148 = vmatprep.subr.mxu0 0.0
    %1149 = vmatpush1.xpose.msra.mxu0 0.0
    %1150 = vmatprep.subr.mxu0 0.0
    %1151 = vmatpush1.xpose.msra.mxu0 0.0
    %1152 = vmatprep.subr.mxu0 0.0
    %1153 = vmatpush1.xpose.msra.mxu0 0.0
    %1154 = vmatprep.subr.mxu0 0.0
    %1155 = vmatpush1.xpose.msra.mxu0 0.0
    %1156 = vmatprep.subr.mxu0 0.0
    %1157 = vmatpush1.xpose.msra.mxu0 0.0
    %1158 = vmatprep.subr.mxu0 0.0
    %1159 = vmatpush1.xpose.msra.mxu0 0.0
    %1160 = vmatprep.subr.mxu0 0.0
    %1161 = vmatpush1.xpose.msra.mxu0 0.0
    %1162 = vmatprep.subr.mxu0 0.0
    %1163 = vmatpush1.xpose.msra.mxu0 0.0
    %1164 = vmatprep.subr.mxu0 0.0
    %1165 = vmatpush1.xpose.msra.mxu0 0.0
    %1166 = vmatprep.subr.mxu0 0.0
    %1167 = vmatpush1.xpose.msra.mxu0 0.0
    %1168 = vmatprep.subr.mxu0 0.0
    %1169 = vmatpush1.xpose.msra.mxu0 0.0
    %1170 = vmatprep.subr.mxu0 0.0
    %1171 = vmatpush1.xpose.msra.mxu0 0.0
    %1172 = vmatprep.subr.mxu0 0.0
    %1173 = vmatpush1.xpose.msra.mxu0 0.0
    %1174 = vmatprep.subr.mxu0 0.0
    %1175 = vmatpush1.xpose.msra.mxu0 0.0
    %1176 = vmatprep.subr.mxu0 0.0
    %1177 = vmatpush1.xpose.msra.mxu0 0.0
    %1178 = vmatprep.mubr.f32.mxu0 0.0
    %v1179 = vand.u32 %v992, 4294901760
    %1180 = vmatmul.mubr.f32.gmra.mrb[0].mxu0 %v1179
    %v1181 = vpop.f32.mrb[0].mxu0
    %v1182 = vadd.f32 %v1076, %v1181
    %v1183 = vpop.f32.mrb[0].mxu0
    %1184 = vmatprep.mubr.f32.mxu0 0.0
    %v1185 = vand.u32 %v995, 4294901760
    %1186 = vmatmul.mubr.f32.gmra.mrb[0].mxu0 %v1185
    %v1187 = vpop.f32.mrb[0].mxu0
    %v1188 = vadd.f32 %v1086, %v1187
    %v1189 = vpop.f32.mrb[0].mxu0
    %1190 = vmatprep.mubr.f32.mxu0 0.0
    %v1191 = vand.u32 %v998, 4294901760
    %1192 = vmatmul.mubr.f32.gmra.mrb[0].mxu0 %v1191
    %v1193 = vpop.f32.mrb[0].mxu0
    %v1194 = vadd.f32 %v1096, %v1193
    %v1195 = vpop.f32.mrb[0].mxu0
    %1196 = vmatprep.mubr.f32.mxu0 0.0
    %v1197 = vand.u32 %v1001, 4294901760
    %1198 = vmatmul.mubr.f32.gmra.mrb[0].mxu0 %v1197
    %v1199 = vpop.f32.mrb[0].mxu0
    %v1200 = vadd.f32 %v1106, %v1199
    %v1201 = vpop.f32.mrb[0].mxu0
    %1202 = vdwg.mxu0
    %1203 = vmatprep.subr.mxu0 0.0
    %v1204 = vand.u32 %v33, 4294901760
    %v1205 = vsub.f32 %v33, %v1204
    %1206 = vmatpush1.xpose.msra.mxu0 %v1205
    %1207 = vmatprep.subr.mxu0 0.0
    %1208 = vmatpush1.xpose.msra.mxu0 0.0
    %1209 = vmatprep.subr.mxu0 0.0
    %1210 = vmatpush1.xpose.msra.mxu0 0.0
    %1211 = vmatprep.subr.mxu0 0.0
    %1212 = vmatpush1.xpose.msra.mxu0 0.0
    %1213 = vmatprep.subr.mxu0 0.0
    %1214 = vmatpush1.xpose.msra.mxu0 0.0
    %1215 = vmatprep.subr.mxu0 0.0
    %1216 = vmatpush1.xpose.msra.mxu0 0.0
    %1217 = vmatprep.subr.mxu0 0.0
    %1218 = vmatpush1.xpose.msra.mxu0 0.0
    %1219 = vmatprep.subr.mxu0 0.0
    %1220 = vmatpush1.xpose.msra.mxu0 0.0
    %1221 = vmatprep.subr.mxu0 0.0
    %1222 = vmatpush1.xpose.msra.mxu0 0.0
    %1223 = vmatprep.subr.mxu0 0.0
    %1224 = vmatpush1.xpose.msra.mxu0 0.0
    %1225 = vmatprep.subr.mxu0 0.0
    %1226 = vmatpush1.xpose.msra.mxu0 0.0
    %1227 = vmatprep.subr.mxu0 0.0
    %1228 = vmatpush1.xpose.msra.mxu0 0.0
    %1229 = vmatprep.subr.mxu0 0.0
    %1230 = vmatpush1.xpose.msra.mxu0 0.0
    %1231 = vmatprep.subr.mxu0 0.0
    %1232 = vmatpush1.xpose.msra.mxu0 0.0
    %1233 = vmatprep.subr.mxu0 0.0
    %1234 = vmatpush1.xpose.msra.mxu0 0.0
    %1235 = vmatprep.subr.mxu0 0.0
    %1236 = vmatpush1.xpose.msra.mxu0 0.0
    %1237 = vmatprep.subr.mxu0 0.0
    %1238 = vmatpush1.xpose.msra.mxu0 0.0
    %1239 = vmatprep.subr.mxu0 0.0
    %1240 = vmatpush1.xpose.msra.mxu0 0.0
    %1241 = vmatprep.subr.mxu0 0.0
    %1242 = vmatpush1.xpose.msra.mxu0 0.0
    %1243 = vmatprep.subr.mxu0 0.0
    %1244 = vmatpush1.xpose.msra.mxu0 0.0
    %1245 = vmatprep.subr.mxu0 0.0
    %1246 = vmatpush1.xpose.msra.mxu0 0.0
    %1247 = vmatprep.subr.mxu0 0.0
    %1248 = vmatpush1.xpose.msra.mxu0 0.0
    %1249 = vmatprep.subr.mxu0 0.0
    %1250 = vmatpush1.xpose.msra.mxu0 0.0
    %1251 = vmatprep.subr.mxu0 0.0
    %1252 = vmatpush1.xpose.msra.mxu0 0.0
    %1253 = vmatprep.subr.mxu0 0.0
    %1254 = vmatpush1.xpose.msra.mxu0 0.0
    %1255 = vmatprep.subr.mxu0 0.0
    %1256 = vmatpush1.xpose.msra.mxu0 0.0
    %1257 = vmatprep.subr.mxu0 0.0
    %1258 = vmatpush1.xpose.msra.mxu0 0.0
    %1259 = vmatprep.subr.mxu0 0.0
    %1260 = vmatpush1.xpose.msra.mxu0 0.0
    %1261 = vmatprep.subr.mxu0 0.0
    %1262 = vmatpush1.xpose.msra.mxu0 0.0
    %1263 = vmatprep.subr.mxu0 0.0
    %1264 = vmatpush1.xpose.msra.mxu0 0.0
    %1265 = vmatprep.subr.mxu0 0.0
    %1266 = vmatpush1.xpose.msra.mxu0 0.0
    %1267 = vmatprep.subr.mxu0 0.0
    %1268 = vmatpush1.xpose.msra.mxu0 0.0
    %1269 = vmatprep.mubr.f32.mxu0 0.0
    %v1270 = vand.u32 %v992, 4294901760
    %v1271 = vsub.f32 %v992, %v1270
    %1272 = vmatmul.mubr.f32.gmra.mrb[0].mxu0 %v1271
    %v1273 = vpop.f32.mrb[0].mxu0
    %v1274 = vadd.f32 %v1182, %v1273
    %v1275 = vpop.f32.mrb[0].mxu0
    %1276 = vmatprep.mubr.f32.mxu0 0.0
    %v1277 = vand.u32 %v995, 4294901760
    %v1278 = vsub.f32 %v995, %v1277
    %1279 = vmatmul.mubr.f32.gmra.mrb[0].mxu0 %v1278
    %v1280 = vpop.f32.mrb[0].mxu0
    %v1281 = vadd.f32 %v1188, %v1280
    %v1282 = vpop.f32.mrb[0].mxu0
    %1283 = vmatprep.mubr.f32.mxu0 0.0
    %v1284 = vand.u32 %v998, 4294901760
    %v1285 = vsub.f32 %v998, %v1284
    %1286 = vmatmul.mubr.f32.gmra.mrb[0].mxu0 %v1285
    %v1287 = vpop.f32.mrb[0].mxu0
    %v1288 = vadd.f32 %v1194, %v1287
    %v1289 = vpop.f32.mrb[0].mxu0
    %1290 = vmatprep.mubr.f32.mxu0 0.0
    %v1291 = vand.u32 %v1001, 4294901760
    %v1292 = vsub.f32 %v1001, %v1291
    %1293 = vmatmul.mubr.f32.gmra.mrb[0].mxu0 %v1292
    %v1294 = vpop.f32.mrb[0].mxu0
    %v1295 = vadd.f32 %v1200, %v1294
    %v1296 = vpop.f32.mrb[0].mxu0
    %1297 = vdwg.mxu0
    %1298 = vmatprep.subr.mxu0 0.0
    %v1299 = vand.u32 %v33, 4294901760
    %1300 = vmatpush1.xpose.msra.mxu0 %v1299
    %1301 = vmatprep.subr.mxu0 0.0
    %1302 = vmatpush1.xpose.msra.mxu0 0.0
    %1303 = vmatprep.subr.mxu0 0.0
    %1304 = vmatpush1.xpose.msra.mxu0 0.0
    %1305 = vmatprep.subr.mxu0 0.0
    %1306 = vmatpush1.xpose.msra.mxu0 0.0
    %1307 = vmatprep.subr.mxu0 0.0
    %1308 = vmatpush1.xpose.msra.mxu0 0.0
    %1309 = vmatprep.subr.mxu0 0.0
    %1310 = vmatpush1.xpose.msra.mxu0 0.0
    %1311 = vmatprep.subr.mxu0 0.0
    %1312 = vmatpush1.xpose.msra.mxu0 0.0
    %1313 = vmatprep.subr.mxu0 0.0
    %1314 = vmatpush1.xpose.msra.mxu0 0.0
    %1315 = vmatprep.subr.mxu0 0.0
    %1316 = vmatpush1.xpose.msra.mxu0 0.0
    %1317 = vmatprep.subr.mxu0 0.0
    %1318 = vmatpush1.xpose.msra.mxu0 0.0
    %1319 = vmatprep.subr.mxu0 0.0
    %1320 = vmatpush1.xpose.msra.mxu0 0.0
    %1321 = vmatprep.subr.mxu0 0.0
    %1322 = vmatpush1.xpose.msra.mxu0 0.0
    %1323 = vmatprep.subr.mxu0 0.0
    %1324 = vmatpush1.xpose.msra.mxu0 0.0
    %1325 = vmatprep.subr.mxu0 0.0
    %1326 = vmatpush1.xpose.msra.mxu0 0.0
    %1327 = vmatprep.subr.mxu0 0.0
    %1328 = vmatpush1.xpose.msra.mxu0 0.0
    %1329 = vmatprep.subr.mxu0 0.0
    %1330 = vmatpush1.xpose.msra.mxu0 0.0
    %1331 = vmatprep.subr.mxu0 0.0
    %1332 = vmatpush1.xpose.msra.mxu0 0.0
    %1333 = vmatprep.subr.mxu0 0.0
    %1334 = vmatpush1.xpose.msra.mxu0 0.0
    %1335 = vmatprep.subr.mxu0 0.0
    %1336 = vmatpush1.xpose.msra.mxu0 0.0
    %1337 = vmatprep.subr.mxu0 0.0
    %1338 = vmatpush1.xpose.msra.mxu0 0.0
    %1339 = vmatprep.subr.mxu0 0.0
    %1340 = vmatpush1.xpose.msra.mxu0 0.0
    %1341 = vmatprep.subr.mxu0 0.0
    %1342 = vmatpush1.xpose.msra.mxu0 0.0
    %1343 = vmatprep.subr.mxu0 0.0
    %1344 = vmatpush1.xpose.msra.mxu0 0.0
    %1345 = vmatprep.subr.mxu0 0.0
    %1346 = vmatpush1.xpose.msra.mxu0 0.0
    %1347 = vmatprep.subr.mxu0 0.0
    %1348 = vmatpush1.xpose.msra.mxu0 0.0
    %1349 = vmatprep.subr.mxu0 0.0
    %1350 = vmatpush1.xpose.msra.mxu0 0.0
    %1351 = vmatprep.subr.mxu0 0.0
    %1352 = vmatpush1.xpose.msra.mxu0 0.0
    %1353 = vmatprep.subr.mxu0 0.0
    %1354 = vmatpush1.xpose.msra.mxu0 0.0
    %1355 = vmatprep.subr.mxu0 0.0
    %1356 = vmatpush1.xpose.msra.mxu0 0.0
    %1357 = vmatprep.subr.mxu0 0.0
    %1358 = vmatpush1.xpose.msra.mxu0 0.0
    %1359 = vmatprep.subr.mxu0 0.0
    %1360 = vmatpush1.xpose.msra.mxu0 0.0
    %1361 = vmatprep.subr.mxu0 0.0
    %1362 = vmatpush1.xpose.msra.mxu0 0.0
    %1363 = vmatprep.mubr.f32.mxu0 0.0
    %v1364 = vand.u32 %v992, 4294901760
    %v1365 = vsub.f32 %v992, %v1364
    %v1366 = vand.u32 %v1365, 4294901760
    %1367 = vmatmul.mubr.f32.gmra.mrb[0].mxu0 %v1366
    %v1368 = vpop.f32.mrb[0].mxu0
    %v1369 = vadd.f32 %v1274, %v1368
    %v1370 = vpop.f32.mrb[0].mxu0
    %1371 = vmatprep.mubr.f32.mxu0 0.0
    %v1372 = vand.u32 %v995, 4294901760
    %v1373 = vsub.f32 %v995, %v1372
    %v1374 = vand.u32 %v1373, 4294901760
    %1375 = vmatmul.mubr.f32.gmra.mrb[0].mxu0 %v1374
    %v1376 = vpop.f32.mrb[0].mxu0
    %v1377 = vadd.f32 %v1281, %v1376
    %v1378 = vpop.f32.mrb[0].mxu0
    %1379 = vmatprep.mubr.f32.mxu0 0.0
    %v1380 = vand.u32 %v998, 4294901760
    %v1381 = vsub.f32 %v998, %v1380
    %v1382 = vand.u32 %v1381, 4294901760
    %1383 = vmatmul.mubr.f32.gmra.mrb[0].mxu0 %v1382
    %v1384 = vpop.f32.mrb[0].mxu0
    %v1385 = vadd.f32 %v1288, %v1384
    %v1386 = vpop.f32.mrb[0].mxu0
    %1387 = vmatprep.mubr.f32.mxu0 0.0
    %v1388 = vand.u32 %v1001, 4294901760
    %v1389 = vsub.f32 %v1001, %v1388
    %v1390 = vand.u32 %v1389, 4294901760
    %1391 = vmatmul.mubr.f32.gmra.mrb[0].mxu0 %v1390
    %v1392 = vpop.f32.mrb[0].mxu0
    %v1393 = vadd.f32 %v1295, %v1392
    %v1394 = vpop.f32.mrb[0].mxu0
    %1395 = vdwg.mxu0
    %1396 = vmatprep.subr.mxu0 0.0
    %v1397 = vand.u32 %v33, 4294901760
    %v1398 = vsub.f32 %v33, %v1397
    %v1399 = vand.u32 %v1398, 4294901760
    %1400 = vmatpush1.xpose.msra.mxu0 %v1399
    %1401 = vmatprep.subr.mxu0 0.0
    %1402 = vmatpush1.xpose.msra.mxu0 0.0
    %1403 = vmatprep.subr.mxu0 0.0
    %1404 = vmatpush1.xpose.msra.mxu0 0.0
    %1405 = vmatprep.subr.mxu0 0.0
    %1406 = vmatpush1.xpose.msra.mxu0 0.0
    %1407 = vmatprep.subr.mxu0 0.0
    %1408 = vmatpush1.xpose.msra.mxu0 0.0
    %1409 = vmatprep.subr.mxu0 0.0
    %1410 = vmatpush1.xpose.msra.mxu0 0.0
    %1411 = vmatprep.subr.mxu0 0.0
    %1412 = vmatpush1.xpose.msra.mxu0 0.0
    %1413 = vmatprep.subr.mxu0 0.0
    %1414 = vmatpush1.xpose.msra.mxu0 0.0
    %1415 = vmatprep.subr.mxu0 0.0
    %1416 = vmatpush1.xpose.msra.mxu0 0.0
    %1417 = vmatprep.subr.mxu0 0.0
    %1418 = vmatpush1.xpose.msra.mxu0 0.0
    %1419 = vmatprep.subr.mxu0 0.0
    %1420 = vmatpush1.xpose.msra.mxu0 0.0
    %1421 = vmatprep.subr.mxu0 0.0
    %1422 = vmatpush1.xpose.msra.mxu0 0.0
    %1423 = vmatprep.subr.mxu0 0.0
    %1424 = vmatpush1.xpose.msra.mxu0 0.0
    %1425 = vmatprep.subr.mxu0 0.0
    %1426 = vmatpush1.xpose.msra.mxu0 0.0
    %1427 = vmatprep.subr.mxu0 0.0
    %1428 = vmatpush1.xpose.msra.mxu0 0.0
    %1429 = vmatprep.subr.mxu0 0.0
    %1430 = vmatpush1.xpose.msra.mxu0 0.0
    %1431 = vmatprep.subr.mxu0 0.0
    %1432 = vmatpush1.xpose.msra.mxu0 0.0
    %1433 = vmatprep.subr.mxu0 0.0
    %1434 = vmatpush1.xpose.msra.mxu0 0.0
    %1435 = vmatprep.subr.mxu0 0.0
    %1436 = vmatpush1.xpose.msra.mxu0 0.0
    %1437 = vmatprep.subr.mxu0 0.0
    %1438 = vmatpush1.xpose.msra.mxu0 0.0
    %1439 = vmatprep.subr.mxu0 0.0
    %1440 = vmatpush1.xpose.msra.mxu0 0.0
    %1441 = vmatprep.subr.mxu0 0.0
    %1442 = vmatpush1.xpose.msra.mxu0 0.0
    %1443 = vmatprep.subr.mxu0 0.0
    %1444 = vmatpush1.xpose.msra.mxu0 0.0
    %1445 = vmatprep.subr.mxu0 0.0
    %1446 = vmatpush1.xpose.msra.mxu0 0.0
    %1447 = vmatprep.subr.mxu0 0.0
    %1448 = vmatpush1.xpose.msra.mxu0 0.0
    %1449 = vmatprep.subr.mxu0 0.0
    %1450 = vmatpush1.xpose.msra.mxu0 0.0
    %1451 = vmatprep.subr.mxu0 0.0
    %1452 = vmatpush1.xpose.msra.mxu0 0.0
    %1453 = vmatprep.subr.mxu0 0.0
    %1454 = vmatpush1.xpose.msra.mxu0 0.0
    %1455 = vmatprep.subr.mxu0 0.0
    %1456 = vmatpush1.xpose.msra.mxu0 0.0
    %1457 = vmatprep.subr.mxu0 0.0
    %1458 = vmatpush1.xpose.msra.mxu0 0.0
    %1459 = vmatprep.subr.mxu0 0.0
    %1460 = vmatpush1.xpose.msra.mxu0 0.0
    %1461 = vmatprep.subr.mxu0 0.0
    %1462 = vmatpush1.xpose.msra.mxu0 0.0
    %1463 = vmatprep.mubr.f32.mxu0 0.0
    %v1464 = vand.u32 %v992, 4294901760
    %1465 = vmatmul.mubr.f32.gmra.mrb[0].mxu0 %v1464
    %v1466 = vpop.f32.mrb[0].mxu0
    %v1467 = vadd.f32 %v1369, %v1466
    %v1468 = vpop.f32.mrb[0].mxu0
    %1469 = vmatprep.mubr.f32.mxu0 0.0
    %v1470 = vand.u32 %v995, 4294901760
    %1471 = vmatmul.mubr.f32.gmra.mrb[0].mxu0 %v1470
    %v1472 = vpop.f32.mrb[0].mxu0
    %v1473 = vadd.f32 %v1377, %v1472
    %v1474 = vpop.f32.mrb[0].mxu0
    %1475 = vmatprep.mubr.f32.mxu0 0.0
    %v1476 = vand.u32 %v998, 4294901760
    %1477 = vmatmul.mubr.f32.gmra.mrb[0].mxu0 %v1476
    %v1478 = vpop.f32.mrb[0].mxu0
    %v1479 = vadd.f32 %v1385, %v1478
    %v1480 = vpop.f32.mrb[0].mxu0
    %1481 = vmatprep.mubr.f32.mxu0 0.0
    %v1482 = vand.u32 %v1001, 4294901760
    %1483 = vmatmul.mubr.f32.gmra.mrb[0].mxu0 %v1482
    %v1484 = vpop.f32.mrb[0].mxu0
    %v1485 = vadd.f32 %v1393, %v1484
    %v1486 = vpop.f32.mrb[0].mxu0
    %1487 = vdwg.mxu0
    %1488 = vmatprep.subr.mxu0 0.0
    %v1489 = vand.u32 %v33, 4294901760
    %1490 = vmatpush1.xpose.msra.mxu0 %v1489
    %1491 = vmatprep.subr.mxu0 0.0
    %1492 = vmatpush1.xpose.msra.mxu0 0.0
    %1493 = vmatprep.subr.mxu0 0.0
    %1494 = vmatpush1.xpose.msra.mxu0 0.0
    %1495 = vmatprep.subr.mxu0 0.0
    %1496 = vmatpush1.xpose.msra.mxu0 0.0
    %1497 = vmatprep.subr.mxu0 0.0
    %1498 = vmatpush1.xpose.msra.mxu0 0.0
    %1499 = vmatprep.subr.mxu0 0.0
    %1500 = vmatpush1.xpose.msra.mxu0 0.0
    %1501 = vmatprep.subr.mxu0 0.0
    %1502 = vmatpush1.xpose.msra.mxu0 0.0
    %1503 = vmatprep.subr.mxu0 0.0
    %1504 = vmatpush1.xpose.msra.mxu0 0.0
    %1505 = vmatprep.subr.mxu0 0.0
    %1506 = vmatpush1.xpose.msra.mxu0 0.0
    %1507 = vmatprep.subr.mxu0 0.0
    %1508 = vmatpush1.xpose.msra.mxu0 0.0
    %1509 = vmatprep.subr.mxu0 0.0
    %1510 = vmatpush1.xpose.msra.mxu0 0.0
    %1511 = vmatprep.subr.mxu0 0.0
    %1512 = vmatpush1.xpose.msra.mxu0 0.0
    %1513 = vmatprep.subr.mxu0 0.0
    %1514 = vmatpush1.xpose.msra.mxu0 0.0
    %1515 = vmatprep.subr.mxu0 0.0
    %1516 = vmatpush1.xpose.msra.mxu0 0.0
    %1517 = vmatprep.subr.mxu0 0.0
    %1518 = vmatpush1.xpose.msra.mxu0 0.0
    %1519 = vmatprep.subr.mxu0 0.0
    %1520 = vmatpush1.xpose.msra.mxu0 0.0
    %1521 = vmatprep.subr.mxu0 0.0
    %1522 = vmatpush1.xpose.msra.mxu0 0.0
    %1523 = vmatprep.subr.mxu0 0.0
    %1524 = vmatpush1.xpose.msra.mxu0 0.0
    %1525 = vmatprep.subr.mxu0 0.0
    %1526 = vmatpush1.xpose.msra.mxu0 0.0
    %1527 = vmatprep.subr.mxu0 0.0
    %1528 = vmatpush1.xpose.msra.mxu0 0.0
    %1529 = vmatprep.subr.mxu0 0.0
    %1530 = vmatpush1.xpose.msra.mxu0 0.0
    %1531 = vmatprep.subr.mxu0 0.0
    %1532 = vmatpush1.xpose.msra.mxu0 0.0
    %1533 = vmatprep.subr.mxu0 0.0
    %1534 = vmatpush1.xpose.msra.mxu0 0.0
    %1535 = vmatprep.subr.mxu0 0.0
    %1536 = vmatpush1.xpose.msra.mxu0 0.0
    %1537 = vmatprep.subr.mxu0 0.0
    %1538 = vmatpush1.xpose.msra.mxu0 0.0
    %1539 = vmatprep.subr.mxu0 0.0
    %1540 = vmatpush1.xpose.msra.mxu0 0.0
    %1541 = vmatprep.subr.mxu0 0.0
    %1542 = vmatpush1.xpose.msra.mxu0 0.0
    %1543 = vmatprep.subr.mxu0 0.0
    %1544 = vmatpush1.xpose.msra.mxu0 0.0
    %1545 = vmatprep.subr.mxu0 0.0
    %1546 = vmatpush1.xpose.msra.mxu0 0.0
    %1547 = vmatprep.subr.mxu0 0.0
    %1548 = vmatpush1.xpose.msra.mxu0 0.0
    %1549 = vmatprep.subr.mxu0 0.0
    %1550 = vmatpush1.xpose.msra.mxu0 0.0
    %1551 = vmatprep.subr.mxu0 0.0
    %1552 = vmatpush1.xpose.msra.mxu0 0.0
    %1553 = vmatprep.mubr.f32.mxu0 0.0
    %v1554 = vand.u32 %v992, 4294901760
    %1555 = vmatmul.mubr.f32.gmra.mrb[0].mxu0 %v1554
    %v1556 = vpop.f32.mrb[0].mxu0
    %v1557 = vadd.f32 %v1467, %v1556
    %v1558 = vpop.f32.mrb[0].mxu0
    %1559 = vmatprep.mubr.f32.mxu0 0.0
    %v1560 = vand.u32 %v995, 4294901760
    %1561 = vmatmul.mubr.f32.gmra.mrb[0].mxu0 %v1560
    %v1562 = vpop.f32.mrb[0].mxu0
    %v1563 = vadd.f32 %v1473, %v1562
    %v1564 = vpop.f32.mrb[0].mxu0
    %1565 = vmatprep.mubr.f32.mxu0 0.0
    %v1566 = vand.u32 %v998, 4294901760
    %1567 = vmatmul.mubr.f32.gmra.mrb[0].mxu0 %v1566
    %v1568 = vpop.f32.mrb[0].mxu0
    %v1569 = vadd.f32 %v1479, %v1568
    %v1570 = vpop.f32.mrb[0].mxu0
    %1571 = vmatprep.mubr.f32.mxu0 0.0
    %v1572 = vand.u32 %v1001, 4294901760
    %1573 = vmatmul.mubr.f32.gmra.mrb[0].mxu0 %v1572
    %v1574 = vpop.f32.mrb[0].mxu0
    %v1575 = vadd.f32 %v1485, %v1574
    %v1576 = vpop.f32.mrb[0].mxu0
    %1577 = vdwg.mxu0
    %v1578 = vld [vmem:[%s4] sm:$0xff]
    %v1579 = vld [vmem:[%s4 + $0x8] sm:$0xff]
    %v1580 = vld [vmem:[%s4 + $0x10] sm:$0xff]
    %v1581 = vld [vmem:[%s4 + $0x18] sm:$0xff]
    %v1583 = vsel %vm970, %v1557, 0
    %v1586 = vsel %vm970, %v1563, 0
    %v1589 = vsel %vm970, %v1569, 0
    %v1592 = vsel %vm970, %v1575, 0
    %1594 = vmatprep.subr.mxu0 0.0
    %v1595 = vand.u32 %v975, 4294901760
    %1596 = vmatpush1.msra.mxu0 %v1595
    %1597 = vmatprep.subr.mxu0 0.0
    %1598 = vmatpush1.msra.mxu0 0.0
    %1599 = vmatprep.subr.mxu0 0.0
    %1600 = vmatpush1.msra.mxu0 0.0
    %1601 = vmatprep.subr.mxu0 0.0
    %1602 = vmatpush1.msra.mxu0 0.0
    %1603 = vmatprep.subr.mxu0 0.0
    %1604 = vmatpush1.msra.mxu0 0.0
    %1605 = vmatprep.subr.mxu0 0.0
    %1606 = vmatpush1.msra.mxu0 0.0
    %1607 = vmatprep.subr.mxu0 0.0
    %1608 = vmatpush1.msra.mxu0 0.0
    %1609 = vmatprep.subr.mxu0 0.0
    %1610 = vmatpush1.msra.mxu0 0.0
    %1611 = vmatprep.subr.mxu0 0.0
    %1612 = vmatpush1.msra.mxu0 0.0
    %1613 = vmatprep.subr.mxu0 0.0
    %1614 = vmatpush1.msra.mxu0 0.0
    %1615 = vmatprep.subr.mxu0 0.0
    %1616 = vmatpush1.msra.mxu0 0.0
    %1617 = vmatprep.subr.mxu0 0.0
    %1618 = vmatpush1.msra.mxu0 0.0
    %1619 = vmatprep.subr.mxu0 0.0
    %1620 = vmatpush1.msra.mxu0 0.0
    %1621 = vmatprep.subr.mxu0 0.0
    %1622 = vmatpush1.msra.mxu0 0.0
    %1623 = vmatprep.subr.mxu0 0.0
    %1624 = vmatpush1.msra.mxu0 0.0
    %1625 = vmatprep.subr.mxu0 0.0
    %1626 = vmatpush1.msra.mxu0 0.0
    %1627 = vmatprep.subr.mxu0 0.0
    %1628 = vmatpush1.msra.mxu0 0.0
    %1629 = vmatprep.subr.mxu0 0.0
    %1630 = vmatpush1.msra.mxu0 0.0
    %1631 = vmatprep.subr.mxu0 0.0
    %1632 = vmatpush1.msra.mxu0 0.0
    %1633 = vmatprep.subr.mxu0 0.0
    %1634 = vmatpush1.msra.mxu0 0.0
    %1635 = vmatprep.subr.mxu0 0.0
    %1636 = vmatpush1.msra.mxu0 0.0
    %1637 = vmatprep.subr.mxu0 0.0
    %1638 = vmatpush1.msra.mxu0 0.0
    %1639 = vmatprep.subr.mxu0 0.0
    %1640 = vmatpush1.msra.mxu0 0.0
    %1641 = vmatprep.subr.mxu0 0.0
    %1642 = vmatpush1.msra.mxu0 0.0
    %1643 = vmatprep.subr.mxu0 0.0
    %1644 = vmatpush1.msra.mxu0 0.0
    %1645 = vmatprep.subr.mxu0 0.0
    %1646 = vmatpush1.msra.mxu0 0.0
    %1647 = vmatprep.subr.mxu0 0.0
    %1648 = vmatpush1.msra.mxu0 0.0
    %1649 = vmatprep.subr.mxu0 0.0
    %1650 = vmatpush1.msra.mxu0 0.0
    %1651 = vmatprep.subr.mxu0 0.0
    %1652 = vmatpush1.msra.mxu0 0.0
    %1653 = vmatprep.subr.mxu0 0.0
    %1654 = vmatpush1.msra.mxu0 0.0
    %1655 = vmatprep.subr.mxu0 0.0
    %1656 = vmatpush1.msra.mxu0 0.0
    %1657 = vmatprep.subr.mxu0 0.0
    %1658 = vmatpush1.msra.mxu0 0.0
    %1659 = vmatprep.mubr.f32.mxu0 0.0
    %v1660 = vand.u32 %v1583, 4294901760
    %v1661 = vsub.f32 %v1583, %v1660
    %v1662 = vand.u32 %v1661, 4294901760
    %v1663 = vsub.f32 %v1661, %v1662
    %v1664 = vand.u32 %v1663, 4294901760
    %1665 = vmatmul.mubr.f32.gmra.mrb[0].mxu0 %v1664
    %v1666 = vpop.f32.mrb[0].mxu0
    %v1667 = vadd.f32 0.0, %v1666
    %v1668 = vpop.f32.mrb[0].mxu0
    %1669 = vmatprep.mubr.f32.mxu0 0.0
    %v1670 = vand.u32 %v1586, 4294901760
    %v1671 = vsub.f32 %v1586, %v1670
    %v1672 = vand.u32 %v1671, 4294901760
    %v1673 = vsub.f32 %v1671, %v1672
    %v1674 = vand.u32 %v1673, 4294901760
    %1675 = vmatmul.mubr.f32.gmra.mrb[0].mxu0 %v1674
    %v1676 = vpop.f32.mrb[0].mxu0
    %v1677 = vadd.f32 0.0, %v1676
    %v1678 = vpop.f32.mrb[0].mxu0
    %1679 = vmatprep.mubr.f32.mxu0 0.0
    %v1680 = vand.u32 %v1589, 4294901760
    %v1681 = vsub.f32 %v1589, %v1680
    %v1682 = vand.u32 %v1681, 4294901760
    %v1683 = vsub.f32 %v1681, %v1682
    %v1684 = vand.u32 %v1683, 4294901760
    %1685 = vmatmul.mubr.f32.gmra.mrb[0].mxu0 %v1684
    %v1686 = vpop.f32.mrb[0].mxu0
    %v1687 = vadd.f32 0.0, %v1686
    %v1688 = vpop.f32.mrb[0].mxu0
    %1689 = vmatprep.mubr.f32.mxu0 0.0
    %v1690 = vand.u32 %v1592, 4294901760
    %v1691 = vsub.f32 %v1592, %v1690
    %v1692 = vand.u32 %v1691, 4294901760
    %v1693 = vsub.f32 %v1691, %v1692
    %v1694 = vand.u32 %v1693, 4294901760
    %1695 = vmatmul.mubr.f32.gmra.mrb[0].mxu0 %v1694
    %v1696 = vpop.f32.mrb[0].mxu0
    %v1697 = vadd.f32 0.0, %v1696
    %v1698 = vpop.f32.mrb[0].mxu0
    %1699 = vdwg.mxu0
    %1700 = vmatprep.subr.mxu0 0.0
    %v1701 = vand.u32 %v975, 4294901760
    %v1702 = vsub.f32 %v975, %v1701
    %v1703 = vand.u32 %v1702, 4294901760
    %v1704 = vsub.f32 %v1702, %v1703
    %v1705 = vand.u32 %v1704, 4294901760
    %1706 = vmatpush1.msra.mxu0 %v1705
    %1707 = vmatprep.subr.mxu0 0.0
    %1708 = vmatpush1.msra.mxu0 0.0
    %1709 = vmatprep.subr.mxu0 0.0
    %1710 = vmatpush1.msra.mxu0 0.0
    %1711 = vmatprep.subr.mxu0 0.0
    %1712 = vmatpush1.msra.mxu0 0.0
    %1713 = vmatprep.subr.mxu0 0.0
    %1714 = vmatpush1.msra.mxu0 0.0
    %1715 = vmatprep.subr.mxu0 0.0
    %1716 = vmatpush1.msra.mxu0 0.0
    %1717 = vmatprep.subr.mxu0 0.0
    %1718 = vmatpush1.msra.mxu0 0.0
    %1719 = vmatprep.subr.mxu0 0.0
    %1720 = vmatpush1.msra.mxu0 0.0
    %1721 = vmatprep.subr.mxu0 0.0
    %1722 = vmatpush1.msra.mxu0 0.0
    %1723 = vmatprep.subr.mxu0 0.0
    %1724 = vmatpush1.msra.mxu0 0.0
    %1725 = vmatprep.subr.mxu0 0.0
    %1726 = vmatpush1.msra.mxu0 0.0
    %1727 = vmatprep.subr.mxu0 0.0
    %1728 = vmatpush1.msra.mxu0 0.0
    %1729 = vmatprep.subr.mxu0 0.0
    %1730 = vmatpush1.msra.mxu0 0.0
    %1731 = vmatprep.subr.mxu0 0.0
    %1732 = vmatpush1.msra.mxu0 0.0
    %1733 = vmatprep.subr.mxu0 0.0
    %1734 = vmatpush1.msra.mxu0 0.0
    %1735 = vmatprep.subr.mxu0 0.0
    %1736 = vmatpush1.msra.mxu0 0.0
    %1737 = vmatprep.subr.mxu0 0.0
    %1738 = vmatpush1.msra.mxu0 0.0
    %1739 = vmatprep.subr.mxu0 0.0
    %1740 = vmatpush1.msra.mxu0 0.0
    %1741 = vmatprep.subr.mxu0 0.0
    %1742 = vmatpush1.msra.mxu0 0.0
    %1743 = vmatprep.subr.mxu0 0.0
    %1744 = vmatpush1.msra.mxu0 0.0
    %1745 = vmatprep.subr.mxu0 0.0
    %1746 = vmatpush1.msra.mxu0 0.0
    %1747 = vmatprep.subr.mxu0 0.0
    %1748 = vmatpush1.msra.mxu0 0.0
    %1749 = vmatprep.subr.mxu0 0.0
    %1750 = vmatpush1.msra.mxu0 0.0
    %1751 = vmatprep.subr.mxu0 0.0
    %1752 = vmatpush1.msra.mxu0 0.0
    %1753 = vmatprep.subr.mxu0 0.0
    %1754 = vmatpush1.msra.mxu0 0.0
    %1755 = vmatprep.subr.mxu0 0.0
    %1756 = vmatpush1.msra.mxu0 0.0
    %1757 = vmatprep.subr.mxu0 0.0
    %1758 = vmatpush1.msra.mxu0 0.0
    %1759 = vmatprep.subr.mxu0 0.0
    %1760 = vmatpush1.msra.mxu0 0.0
    %1761 = vmatprep.subr.mxu0 0.0
    %1762 = vmatpush1.msra.mxu0 0.0
    %1763 = vmatprep.subr.mxu0 0.0
    %1764 = vmatpush1.msra.mxu0 0.0
    %1765 = vmatprep.subr.mxu0 0.0
    %1766 = vmatpush1.msra.mxu0 0.0
    %1767 = vmatprep.subr.mxu0 0.0
    %1768 = vmatpush1.msra.mxu0 0.0
    %1769 = vmatprep.mubr.f32.mxu0 0.0
    %v1770 = vand.u32 %v1583, 4294901760
    %1771 = vmatmul.mubr.f32.gmra.mrb[0].mxu0 %v1770
    %v1772 = vpop.f32.mrb[0].mxu0
    %v1773 = vadd.f32 %v1667, %v1772
    %v1774 = vpop.f32.mrb[0].mxu0
    %1775 = vmatprep.mubr.f32.mxu0 0.0
    %v1776 = vand.u32 %v1586, 4294901760
    %1777 = vmatmul.mubr.f32.gmra.mrb[0].mxu0 %v1776
    %v1778 = vpop.f32.mrb[0].mxu0
    %v1779 = vadd.f32 %v1677, %v1778
    %v1780 = vpop.f32.mrb[0].mxu0
    %1781 = vmatprep.mubr.f32.mxu0 0.0
    %v1782 = vand.u32 %v1589, 4294901760
    %1783 = vmatmul.mubr.f32.gmra.mrb[0].mxu0 %v1782
    %v1784 = vpop.f32.mrb[0].mxu0
    %v1785 = vadd.f32 %v1687, %v1784
    %v1786 = vpop.f32.mrb[0].mxu0
    %1787 = vmatprep.mubr.f32.mxu0 0.0
    %v1788 = vand.u32 %v1592, 4294901760
    %1789 = vmatmul.mubr.f32.gmra.mrb[0].mxu0 %v1788
    %v1790 = vpop.f32.mrb[0].mxu0
    %v1791 = vadd.f32 %v1697, %v1790
    %v1792 = vpop.f32.mrb[0].mxu0
    %1793 = vdwg.mxu0
    %1794 = vmatprep.subr.mxu0 0.0
    %v1795 = vand.u32 %v975, 4294901760
    %v1796 = vsub.f32 %v975, %v1795
    %1797 = vmatpush1.msra.mxu0 %v1796
    %1798 = vmatprep.subr.mxu0 0.0
    %1799 = vmatpush1.msra.mxu0 0.0
    %1800 = vmatprep.subr.mxu0 0.0
    %1801 = vmatpush1.msra.mxu0 0.0
    %1802 = vmatprep.subr.mxu0 0.0
    %1803 = vmatpush1.msra.mxu0 0.0
    %1804 = vmatprep.subr.mxu0 0.0
    %1805 = vmatpush1.msra.mxu0 0.0
    %1806 = vmatprep.subr.mxu0 0.0
    %1807 = vmatpush1.msra.mxu0 0.0
    %1808 = vmatprep.subr.mxu0 0.0
    %1809 = vmatpush1.msra.mxu0 0.0
    %1810 = vmatprep.subr.mxu0 0.0
    %1811 = vmatpush1.msra.mxu0 0.0
    %1812 = vmatprep.subr.mxu0 0.0
    %1813 = vmatpush1.msra.mxu0 0.0
    %1814 = vmatprep.subr.mxu0 0.0
    %1815 = vmatpush1.msra.mxu0 0.0
    %1816 = vmatprep.subr.mxu0 0.0
    %1817 = vmatpush1.msra.mxu0 0.0
    %1818 = vmatprep.subr.mxu0 0.0
    %1819 = vmatpush1.msra.mxu0 0.0
    %1820 = vmatprep.subr.mxu0 0.0
    %1821 = vmatpush1.msra.mxu0 0.0
    %1822 = vmatprep.subr.mxu0 0.0
    %1823 = vmatpush1.msra.mxu0 0.0
    %1824 = vmatprep.subr.mxu0 0.0
    %1825 = vmatpush1.msra.mxu0 0.0
    %1826 = vmatprep.subr.mxu0 0.0
    %1827 = vmatpush1.msra.mxu0 0.0
    %1828 = vmatprep.subr.mxu0 0.0
    %1829 = vmatpush1.msra.mxu0 0.0
    %1830 = vmatprep.subr.mxu0 0.0
    %1831 = vmatpush1.msra.mxu0 0.0
    %1832 = vmatprep.subr.mxu0 0.0
    %1833 = vmatpush1.msra.mxu0 0.0
    %1834 = vmatprep.subr.mxu0 0.0
    %1835 = vmatpush1.msra.mxu0 0.0
    %1836 = vmatprep.subr.mxu0 0.0
    %1837 = vmatpush1.msra.mxu0 0.0
    %1838 = vmatprep.subr.mxu0 0.0
    %1839 = vmatpush1.msra.mxu0 0.0
    %1840 = vmatprep.subr.mxu0 0.0
    %1841 = vmatpush1.msra.mxu0 0.0
    %1842 = vmatprep.subr.mxu0 0.0
    %1843 = vmatpush1.msra.mxu0 0.0
    %1844 = vmatprep.subr.mxu0 0.0
    %1845 = vmatpush1.msra.mxu0 0.0
    %1846 = vmatprep.subr.mxu0 0.0
    %1847 = vmatpush1.msra.mxu0 0.0
    %1848 = vmatprep.subr.mxu0 0.0
    %1849 = vmatpush1.msra.mxu0 0.0
    %1850 = vmatprep.subr.mxu0 0.0
    %1851 = vmatpush1.msra.mxu0 0.0
    %1852 = vmatprep.subr.mxu0 0.0
    %1853 = vmatpush1.msra.mxu0 0.0
    %1854 = vmatprep.subr.mxu0 0.0
    %1855 = vmatpush1.msra.mxu0 0.0
    %1856 = vmatprep.subr.mxu0 0.0
    %1857 = vmatpush1.msra.mxu0 0.0
    %1858 = vmatprep.subr.mxu0 0.0
    %1859 = vmatpush1.msra.mxu0 0.0
    %1860 = vmatprep.mubr.f32.mxu0 0.0
    %v1861 = vand.u32 %v1583, 4294901760
    %v1862 = vsub.f32 %v1583, %v1861
    %1863 = vmatmul.mubr.f32.gmra.mrb[0].mxu0 %v1862
    %v1864 = vpop.f32.mrb[0].mxu0
    %v1865 = vadd.f32 %v1773, %v1864
    %v1866 = vpop.f32.mrb[0].mxu0
    %1867 = vmatprep.mubr.f32.mxu0 0.0
    %v1868 = vand.u32 %v1586, 4294901760
    %v1869 = vsub.f32 %v1586, %v1868
    %1870 = vmatmul.mubr.f32.gmra.mrb[0].mxu0 %v1869
    %v1871 = vpop.f32.mrb[0].mxu0
    %v1872 = vadd.f32 %v1779, %v1871
    %v1873 = vpop.f32.mrb[0].mxu0
    %1874 = vmatprep.mubr.f32.mxu0 0.0
    %v1875 = vand.u32 %v1589, 4294901760
    %v1876 = vsub.f32 %v1589, %v1875
    %1877 = vmatmul.mubr.f32.gmra.mrb[0].mxu0 %v1876
    %v1878 = vpop.f32.mrb[0].mxu0
    %v1879 = vadd.f32 %v1785, %v1878
    %v1880 = vpop.f32.mrb[0].mxu0
    %1881 = vmatprep.mubr.f32.mxu0 0.0
    %v1882 = vand.u32 %v1592, 4294901760
    %v1883 = vsub.f32 %v1592, %v1882
    %1884 = vmatmul.mubr.f32.gmra.mrb[0].mxu0 %v1883
    %v1885 = vpop.f32.mrb[0].mxu0
    %v1886 = vadd.f32 %v1791, %v1885
    %v1887 = vpop.f32.mrb[0].mxu0
    %1888 = vdwg.mxu0
    %1889 = vmatprep.subr.mxu0 0.0
    %v1890 = vand.u32 %v975, 4294901760
    %1891 = vmatpush1.msra.mxu0 %v1890
    %1892 = vmatprep.subr.mxu0 0.0
    %1893 = vmatpush1.msra.mxu0 0.0
    %1894 = vmatprep.subr.mxu0 0.0
    %1895 = vmatpush1.msra.mxu0 0.0
    %1896 = vmatprep.subr.mxu0 0.0
    %1897 = vmatpush1.msra.mxu0 0.0
    %1898 = vmatprep.subr.mxu0 0.0
    %1899 = vmatpush1.msra.mxu0 0.0
    %1900 = vmatprep.subr.mxu0 0.0
    %1901 = vmatpush1.msra.mxu0 0.0
    %1902 = vmatprep.subr.mxu0 0.0
    %1903 = vmatpush1.msra.mxu0 0.0
    %1904 = vmatprep.subr.mxu0 0.0
    %1905 = vmatpush1.msra.mxu0 0.0
    %1906 = vmatprep.subr.mxu0 0.0
    %1907 = vmatpush1.msra.mxu0 0.0
    %1908 = vmatprep.subr.mxu0 0.0
    %1909 = vmatpush1.msra.mxu0 0.0
    %1910 = vmatprep.subr.mxu0 0.0
    %1911 = vmatpush1.msra.mxu0 0.0
    %1912 = vmatprep.subr.mxu0 0.0
    %1913 = vmatpush1.msra.mxu0 0.0
    %1914 = vmatprep.subr.mxu0 0.0
    %1915 = vmatpush1.msra.mxu0 0.0
    %1916 = vmatprep.subr.mxu0 0.0
    %1917 = vmatpush1.msra.mxu0 0.0
    %1918 = vmatprep.subr.mxu0 0.0
    %1919 = vmatpush1.msra.mxu0 0.0
    %1920 = vmatprep.subr.mxu0 0.0
    %1921 = vmatpush1.msra.mxu0 0.0
    %1922 = vmatprep.subr.mxu0 0.0
    %1923 = vmatpush1.msra.mxu0 0.0
    %1924 = vmatprep.subr.mxu0 0.0
    %1925 = vmatpush1.msra.mxu0 0.0
    %1926 = vmatprep.subr.mxu0 0.0
    %1927 = vmatpush1.msra.mxu0 0.0
    %1928 = vmatprep.subr.mxu0 0.0
    %1929 = vmatpush1.msra.mxu0 0.0
    %1930 = vmatprep.subr.mxu0 0.0
    %1931 = vmatpush1.msra.mxu0 0.0
    %1932 = vmatprep.subr.mxu0 0.0
    %1933 = vmatpush1.msra.mxu0 0.0
    %1934 = vmatprep.subr.mxu0 0.0
    %1935 = vmatpush1.msra.mxu0 0.0
    %1936 = vmatprep.subr.mxu0 0.0
    %1937 = vmatpush1.msra.mxu0 0.0
    %1938 = vmatprep.subr.mxu0 0.0
    %1939 = vmatpush1.msra.mxu0 0.0
    %1940 = vmatprep.subr.mxu0 0.0
    %1941 = vmatpush1.msra.mxu0 0.0
    %1942 = vmatprep.subr.mxu0 0.0
    %1943 = vmatpush1.msra.mxu0 0.0
    %1944 = vmatprep.subr.mxu0 0.0
    %1945 = vmatpush1.msra.mxu0 0.0
    %1946 = vmatprep.subr.mxu0 0.0
    %1947 = vmatpush1.msra.mxu0 0.0
    %1948 = vmatprep.subr.mxu0 0.0
    %1949 = vmatpush1.msra.mxu0 0.0
    %1950 = vmatprep.subr.mxu0 0.0
    %1951 = vmatpush1.msra.mxu0 0.0
    %1952 = vmatprep.subr.mxu0 0.0
    %1953 = vmatpush1.msra.mxu0 0.0
    %1954 = vmatprep.mubr.f32.mxu0 0.0
    %v1955 = vand.u32 %v1583, 4294901760
    %v1956 = vsub.f32 %v1583, %v1955
    %v1957 = vand.u32 %v1956, 4294901760
    %1958 = vmatmul.mubr.f32.gmra.mrb[0].mxu0 %v1957
    %v1959 = vpop.f32.mrb[0].mxu0
    %v1960 = vadd.f32 %v1865, %v1959
    %v1961 = vpop.f32.mrb[0].mxu0
    %1962 = vmatprep.mubr.f32.mxu0 0.0
    %v1963 = vand.u32 %v1586, 4294901760
    %v1964 = vsub.f32 %v1586, %v1963
    %v1965 = vand.u32 %v1964, 4294901760
    %1966 = vmatmul.mubr.f32.gmra.mrb[0].mxu0 %v1965
    %v1967 = vpop.f32.mrb[0].mxu0
    %v1968 = vadd.f32 %v1872, %v1967
    %v1969 = vpop.f32.mrb[0].mxu0
    %1970 = vmatprep.mubr.f32.mxu0 0.0
    %v1971 = vand.u32 %v1589, 4294901760
    %v1972 = vsub.f32 %v1589, %v1971
    %v1973 = vand.u32 %v1972, 4294901760
    %1974 = vmatmul.mubr.f32.gmra.mrb[0].mxu0 %v1973
    %v1975 = vpop.f32.mrb[0].mxu0
    %v1976 = vadd.f32 %v1879, %v1975
    %v1977 = vpop.f32.mrb[0].mxu0
    %1978 = vmatprep.mubr.f32.mxu0 0.0
    %v1979 = vand.u32 %v1592, 4294901760
    %v1980 = vsub.f32 %v1592, %v1979
    %v1981 = vand.u32 %v1980, 4294901760
    %1982 = vmatmul.mubr.f32.gmra.mrb[0].mxu0 %v1981
    %v1983 = vpop.f32.mrb[0].mxu0
    %v1984 = vadd.f32 %v1886, %v1983
    %v1985 = vpop.f32.mrb[0].mxu0
    %1986 = vdwg.mxu0
    %1987 = vmatprep.subr.mxu0 0.0
    %v1988 = vand.u32 %v975, 4294901760
    %v1989 = vsub.f32 %v975, %v1988
    %v1990 = vand.u32 %v1989, 4294901760
    %1991 = vmatpush1.msra.mxu0 %v1990
    %1992 = vmatprep.subr.mxu0 0.0
    %1993 = vmatpush1.msra.mxu0 0.0
    %1994 = vmatprep.subr.mxu0 0.0
    %1995 = vmatpush1.msra.mxu0 0.0
    %1996 = vmatprep.subr.mxu0 0.0
    %1997 = vmatpush1.msra.mxu0 0.0
    %1998 = vmatprep.subr.mxu0 0.0
    %1999 = vmatpush1.msra.mxu0 0.0
    %2000 = vmatprep.subr.mxu0 0.0
    %2001 = vmatpush1.msra.mxu0 0.0
    %2002 = vmatprep.subr.mxu0 0.0
    %2003 = vmatpush1.msra.mxu0 0.0
    %2004 = vmatprep.subr.mxu0 0.0
    %2005 = vmatpush1.msra.mxu0 0.0
    %2006 = vmatprep.subr.mxu0 0.0
    %2007 = vmatpush1.msra.mxu0 0.0
    %2008 = vmatprep.subr.mxu0 0.0
    %2009 = vmatpush1.msra.mxu0 0.0
    %2010 = vmatprep.subr.mxu0 0.0
    %2011 = vmatpush1.msra.mxu0 0.0
    %2012 = vmatprep.subr.mxu0 0.0
    %2013 = vmatpush1.msra.mxu0 0.0
    %2014 = vmatprep.subr.mxu0 0.0
    %2015 = vmatpush1.msra.mxu0 0.0
    %2016 = vmatprep.subr.mxu0 0.0
    %2017 = vmatpush1.msra.mxu0 0.0
    %2018 = vmatprep.subr.mxu0 0.0
    %2019 = vmatpush1.msra.mxu0 0.0
    %2020 = vmatprep.subr.mxu0 0.0
    %2021 = vmatpush1.msra.mxu0 0.0
    %2022 = vmatprep.subr.mxu0 0.0
    %2023 = vmatpush1.msra.mxu0 0.0
    %2024 = vmatprep.subr.mxu0 0.0
    %2025 = vmatpush1.msra.mxu0 0.0
    %2026 = vmatprep.subr.mxu0 0.0
    %2027 = vmatpush1.msra.mxu0 0.0
    %2028 = vmatprep.subr.mxu0 0.0
    %2029 = vmatpush1.msra.mxu0 0.0
    %2030 = vmatprep.subr.mxu0 0.0
    %2031 = vmatpush1.msra.mxu0 0.0
    %2032 = vmatprep.subr.mxu0 0.0
    %2033 = vmatpush1.msra.mxu0 0.0
    %2034 = vmatprep.subr.mxu0 0.0
    %2035 = vmatpush1.msra.mxu0 0.0
    %2036 = vmatprep.subr.mxu0 0.0
    %2037 = vmatpush1.msra.mxu0 0.0
    %2038 = vmatprep.subr.mxu0 0.0
    %2039 = vmatpush1.msra.mxu0 0.0
    %2040 = vmatprep.subr.mxu0 0.0
    %2041 = vmatpush1.msra.mxu0 0.0
    %2042 = vmatprep.subr.mxu0 0.0
    %2043 = vmatpush1.msra.mxu0 0.0
    %2044 = vmatprep.subr.mxu0 0.0
    %2045 = vmatpush1.msra.mxu0 0.0
    %2046 = vmatprep.subr.mxu0 0.0
    %2047 = vmatpush1.msra.mxu0 0.0
    %2048 = vmatprep.subr.mxu0 0.0
    %2049 = vmatpush1.msra.mxu0 0.0
    %2050 = vmatprep.subr.mxu0 0.0
    %2051 = vmatpush1.msra.mxu0 0.0
    %2052 = vmatprep.subr.mxu0 0.0
    %2053 = vmatpush1.msra.mxu0 0.0
    %2054 = vmatprep.mubr.f32.mxu0 0.0
    %v2055 = vand.u32 %v1583, 4294901760
    %2056 = vmatmul.mubr.f32.gmra.mrb[0].mxu0 %v2055
    %v2057 = vpop.f32.mrb[0].mxu0
    %v2058 = vadd.f32 %v1960, %v2057
    %v2059 = vpop.f32.mrb[0].mxu0
    %2060 = vmatprep.mubr.f32.mxu0 0.0
    %v2061 = vand.u32 %v1586, 4294901760
    %2062 = vmatmul.mubr.f32.gmra.mrb[0].mxu0 %v2061
    %v2063 = vpop.f32.mrb[0].mxu0
    %v2064 = vadd.f32 %v1968, %v2063
    %v2065 = vpop.f32.mrb[0].mxu0
    %2066 = vmatprep.mubr.f32.mxu0 0.0
    %v2067 = vand.u32 %v1589, 4294901760
    %2068 = vmatmul.mubr.f32.gmra.mrb[0].mxu0 %v2067
    %v2069 = vpop.f32.mrb[0].mxu0
    %v2070 = vadd.f32 %v1976, %v2069
    %v2071 = vpop.f32.mrb[0].mxu0
    %2072 = vmatprep.mubr.f32.mxu0 0.0
    %v2073 = vand.u32 %v1592, 4294901760
    %2074 = vmatmul.mubr.f32.gmra.mrb[0].mxu0 %v2073
    %v2075 = vpop.f32.mrb[0].mxu0
    %v2076 = vadd.f32 %v1984, %v2075
    %v2077 = vpop.f32.mrb[0].mxu0
    %2078 = vdwg.mxu0
    %2079 = vmatprep.subr.mxu0 0.0
    %v2080 = vand.u32 %v975, 4294901760
    %2081 = vmatpush1.msra.mxu0 %v2080
    %2082 = vmatprep.subr.mxu0 0.0
    %2083 = vmatpush1.msra.mxu0 0.0
    %2084 = vmatprep.subr.mxu0 0.0
    %2085 = vmatpush1.msra.mxu0 0.0
    %2086 = vmatprep.subr.mxu0 0.0
    %2087 = vmatpush1.msra.mxu0 0.0
    %2088 = vmatprep.subr.mxu0 0.0
    %2089 = vmatpush1.msra.mxu0 0.0
    %2090 = vmatprep.subr.mxu0 0.0
    %2091 = vmatpush1.msra.mxu0 0.0
    %2092 = vmatprep.subr.mxu0 0.0
    %2093 = vmatpush1.msra.mxu0 0.0
    %2094 = vmatprep.subr.mxu0 0.0
    %2095 = vmatpush1.msra.mxu0 0.0
    %2096 = vmatprep.subr.mxu0 0.0
    %2097 = vmatpush1.msra.mxu0 0.0
    %2098 = vmatprep.subr.mxu0 0.0
    %2099 = vmatpush1.msra.mxu0 0.0
    %2100 = vmatprep.subr.mxu0 0.0
    %2101 = vmatpush1.msra.mxu0 0.0
    %2102 = vmatprep.subr.mxu0 0.0
    %2103 = vmatpush1.msra.mxu0 0.0
    %2104 = vmatprep.subr.mxu0 0.0
    %2105 = vmatpush1.msra.mxu0 0.0
    %2106 = vmatprep.subr.mxu0 0.0
    %2107 = vmatpush1.msra.mxu0 0.0
    %2108 = vmatprep.subr.mxu0 0.0
    %2109 = vmatpush1.msra.mxu0 0.0
    %2110 = vmatprep.subr.mxu0 0.0
    %2111 = vmatpush1.msra.mxu0 0.0
    %2112 = vmatprep.subr.mxu0 0.0
    %2113 = vmatpush1.msra.mxu0 0.0
    %2114 = vmatprep.subr.mxu0 0.0
    %2115 = vmatpush1.msra.mxu0 0.0
    %2116 = vmatprep.subr.mxu0 0.0
    %2117 = vmatpush1.msra.mxu0 0.0
    %2118 = vmatprep.subr.mxu0 0.0
    %2119 = vmatpush1.msra.mxu0 0.0
    %2120 = vmatprep.subr.mxu0 0.0
    %2121 = vmatpush1.msra.mxu0 0.0
    %2122 = vmatprep.subr.mxu0 0.0
    %2123 = vmatpush1.msra.mxu0 0.0
    %2124 = vmatprep.subr.mxu0 0.0
    %2125 = vmatpush1.msra.mxu0 0.0
    %2126 = vmatprep.subr.mxu0 0.0
    %2127 = vmatpush1.msra.mxu0 0.0
    %2128 = vmatprep.subr.mxu0 0.0
    %2129 = vmatpush1.msra.mxu0 0.0
    %2130 = vmatprep.subr.mxu0 0.0
    %2131 = vmatpush1.msra.mxu0 0.0
    %2132 = vmatprep.subr.mxu0 0.0
    %2133 = vmatpush1.msra.mxu0 0.0
    %2134 = vmatprep.subr.mxu0 0.0
    %2135 = vmatpush1.msra.mxu0 0.0
    %2136 = vmatprep.subr.mxu0 0.0
    %2137 = vmatpush1.msra.mxu0 0.0
    %2138 = vmatprep.subr.mxu0 0.0
    %2139 = vmatpush1.msra.mxu0 0.0
    %2140 = vmatprep.subr.mxu0 0.0
    %2141 = vmatpush1.msra.mxu0 0.0
    %2142 = vmatprep.subr.mxu0 0.0
    %2143 = vmatpush1.msra.mxu0 0.0
    %2144 = vmatprep.mubr.f32.mxu0 0.0
    %v2145 = vand.u32 %v1583, 4294901760
    %2146 = vmatmul.mubr.f32.gmra.mrb[0].mxu0 %v2145
    %v2147 = vpop.f32.mrb[0].mxu0
    %v2148 = vadd.f32 %v2058, %v2147
    %v2149 = vpop.f32.mrb[0].mxu0
    %2150 = vmatprep.mubr.f32.mxu0 0.0
    %v2151 = vand.u32 %v1586, 4294901760
    %2152 = vmatmul.mubr.f32.gmra.mrb[0].mxu0 %v2151
    %v2153 = vpop.f32.mrb[0].mxu0
    %v2154 = vadd.f32 %v2064, %v2153
    %v2155 = vpop.f32.mrb[0].mxu0
    %2156 = vmatprep.mubr.f32.mxu0 0.0
    %v2157 = vand.u32 %v1589, 4294901760
    %2158 = vmatmul.mubr.f32.gmra.mrb[0].mxu0 %v2157
    %v2159 = vpop.f32.mrb[0].mxu0
    %v2160 = vadd.f32 %v2070, %v2159
    %v2161 = vpop.f32.mrb[0].mxu0
    %2162 = vmatprep.mubr.f32.mxu0 0.0
    %v2163 = vand.u32 %v1592, 4294901760
    %2164 = vmatmul.mubr.f32.gmra.mrb[0].mxu0 %v2163
    %v2165 = vpop.f32.mrb[0].mxu0
    %v2166 = vadd.f32 %v2076, %v2165
    %v2167 = vpop.f32.mrb[0].mxu0
    %2168 = vdwg.mxu0
    %v2169 = vadd.f32 %v1578, %v2148
    %v2170 = vadd.f32 %v1579, %v2154
    %v2171 = vadd.f32 %v1580, %v2160
    %v2172 = vadd.f32 %v1581, %v2166
    %2173 = vst.msk [vmem:[%s4] sm:$0xff] %vm970, %v2169
    %2174 = vst.msk [vmem:[%s4 + $0x8] sm:$0xff] %vm970, %v2170
    %2175 = vst.msk [vmem:[%s4 + $0x10] sm:$0xff] %vm970, %v2171
    %2176 = vst.msk [vmem:[%s4 + $0x18] sm:$0xff] %vm970, %v2172
    // Predicated region
    $region18: #{tpu_custom_call.1} parent=1 // pred_check
      _
    $region19: #{tpu_custom_call.1} parent=1 // pred_check_branch
      %2178 = sbr.rel (0) target = $region21
    $region20: #{tpu_custom_call.1} parent=1 // pred_region
      %s2180 = ssub.s32 16, 16
      %2181 = vsyncadd [#allocation3], %s2180
      %s2183 = sshll.u32 [#allocation2], 4
      %s2184 = int_to_ptr.vmem [resolvable:$true] %s2183
      %2186 = dma.vmem_to_hbm [thread:$0]  %s2184, 16, %s3, [#allocation3]
    $region21: #{tpu_custom_call.1} parent=1 // pred_fallthru
      _
    // Predicated region
    $region22: #{tpu_custom_call.1} parent=1 // pred_check
      _
    $region23: #{tpu_custom_call.1} parent=1 // pred_check_branch
      %2188 = sbr.rel (0) target = $region25
    $region24: #{tpu_custom_call.1} parent=1 // pred_region
      _
    $region25: #{tpu_custom_call.1} parent=1 // pred_fallthru
      _
    // Predicated region
    $region26: #{tpu_custom_call.1} parent=1 // pred_check
      _
    $region27: #{tpu_custom_call.1} parent=1 // pred_check_branch
      %2190 = sbr.rel (0) target = $region29
    $region28: #{tpu_custom_call.1} parent=1 // pred_region
      %2191 = dma.done [#allocation3], 16
    $region29: #{tpu_custom_call.1} parent=1 // pred_fallthru
      _
    // Predicated region
    $region30: #{tpu_custom_call.1} parent=1 // pred_check
      _
    $region31: #{tpu_custom_call.1} parent=1 // pred_check_branch
      %2193 = sbr.rel (0) target = $region33
    $region32: #{tpu_custom_call.1} parent=1 // pred_region
      _
    $region33: #{tpu_custom_call.1} parent=1 // pred_fallthru
      _
    %2194 = vsyncpa [#allocation3], 1

</llo_original>
